<compile_context>
chip_gen: v7x
topology: tpu7x:2x2x1
jax: 0.10.0
libtpu: 0.0.40
codegen_flags: <defaults>
</compile_context>

<pallas_src>
import jax
import jax.numpy as jnp
from jax.experimental import pallas as pl
from jax.experimental.pallas import tpu as pltpu

LN_EPS = 1e-5  # PyTorch nn.LayerNorm default


def imitation_head_kernel(
    x_ref,                  # (TM, d_model)   native dtype (f32 or bf16)
    w1_ref, b1_ref,         # (d_model, d_ffn), (1, d_ffn)
    w2_ref, b2_ref,         # (d_ffn, d_half), (1, d_half)   [LN1 affine folded in]
    w3_ref, b3_ref,         # (1, d_half), (1, 1)             [LN2 affine folded in]
    o_ref,                  # (TM, 1)
):
    # ---- Linear 1 (MXU, f32 accumulation) + bias + ReLU ----
    h = jnp.dot(x_ref[...], w1_ref[...], preferred_element_type=jnp.float32)
    h = jnp.maximum(h + b1_ref[...].astype(jnp.float32), 0.0)

    # ---- LayerNorm 1: pure normalization (affine folded into Linear 2) ----
    mu = jnp.mean(h, axis=-1, keepdims=True)
    var = jnp.mean(jnp.square(h - mu), axis=-1, keepdims=True)
    h = (h - mu) * jax.lax.rsqrt(var + LN_EPS)

    # ---- Linear 2 (MXU) + bias + ReLU; cast activations to weight dtype ----
    h2 = jnp.dot(h.astype(w2_ref.dtype), w2_ref[...],
                 preferred_element_type=jnp.float32)
    h2 = jnp.maximum(h2 + b2_ref[...].astype(jnp.float32), 0.0)

    # ---- LayerNorm 2: pure normalization (affine folded into Linear 3) ----
    mu2 = jnp.mean(h2, axis=-1, keepdims=True)
    var2 = jnp.mean(jnp.square(h2 - mu2), axis=-1, keepdims=True)
    h2 = (h2 - mu2) * jax.lax.rsqrt(var2 + LN_EPS)

    # ---- Linear 3 (d_half -> 1): VPU multiply + lane reduce (skip N=1 MXU) ----
    score = jnp.sum(h2 * w3_ref[...].astype(jnp.float32),
                    axis=-1, keepdims=True)
    score = score + b3_ref[...].astype(jnp.float32)
    o_ref[...] = score.astype(o_ref.dtype)


def init_params(key, d_model, d_ffn, dtype=jnp.float32):
    """Deterministic synthetic parameters matching the torch module's shapes."""
    d_half = d_ffn // 2
    ks = jax.random.split(key, 6)
    scale1 = 1.0 / jnp.sqrt(d_model)
    scale2 = 1.0 / jnp.sqrt(d_ffn)
    scale3 = 1.0 / jnp.sqrt(d_half)
    return {
        "w1": jax.random.normal(ks[0], (d_model, d_ffn), dtype) * scale1,
        "b1": jax.random.normal(ks[1], (1, d_ffn), dtype) * scale1,
        "g1": jnp.ones((1, d_ffn), dtype),
        "be1": jnp.zeros((1, d_ffn), dtype),
        "w2": jax.random.normal(ks[2], (d_ffn, d_half), dtype) * scale2,
        "b2": jax.random.normal(ks[3], (1, d_half), dtype) * scale2,
        "g2": jnp.ones((1, d_half), dtype),
        "be2": jnp.zeros((1, d_half), dtype),
        "w3": jax.random.normal(ks[4], (d_half, 1), dtype) * scale3,
        "b3": jax.random.normal(ks[5], (1, 1), dtype) * scale3,
    }


def fold_params(params):
    """Fold LayerNorm affine params into the subsequent Linear layers.

    LN(z)*g + be feeding Linear(W, b) is algebraically identical to
    LN_no_affine(z) feeding Linear(diag(g) @ W, b + be @ W).
    Folding is done once, in f32, in the wrapper.
    """
    f32 = jnp.float32
    w1, b1 = params["w1"], params["b1"]
    w2, b2, g1, be1 = params["w2"], params["b2"], params["g1"], params["be1"]
    w3, b3, g2, be2 = params["w3"], params["b3"], params["g2"], params["be2"]
    d_ffn, d_half = w2.shape

    w2f = (w2.astype(f32) * g1.astype(f32).reshape(d_ffn, 1)).astype(w2.dtype)
    b2f = (b2.astype(f32) + be1.astype(f32) @ w2.astype(f32)).astype(b2.dtype)
    w3f = (w3.astype(f32).reshape(1, d_half) * g2.astype(f32)).astype(w3.dtype)
    b3f = (b3.astype(f32) + be2.astype(f32) @ w3.astype(f32)).astype(b3.dtype)
    return w1, b1, w2f, b2f, w3f, b3f


def imitation_head_forward(decoder_output, params, *, tm=256):
    """decoder_output: (B, V, d_model) -> {'imitation_score': (B, V, 1)}"""
    B, V, d_model = decoder_output.shape
    d_ffn = params["w1"].shape[1]
    d_half = d_ffn // 2

    rows = B * V
    num_tiles = pl.cdiv(rows, tm)
    rows_p = num_tiles * tm

    x2d = decoder_output.reshape(rows, d_model)
    if rows_p != rows:
        x2d = jnp.pad(x2d, ((0, rows_p - rows), (0, 0)))

    w1, b1, w2f, b2f, w3f, b3f = fold_params(params)

    full = lambda i: (0, 0)  # whole-array blocks for the (small) parameters

    out2d = pl.pallas_call(
        imitation_head_kernel,
        out_shape=jax.ShapeDtypeStruct((rows_p, 1), decoder_output.dtype),
        grid_spec=pltpu.PrefetchScalarGridSpec(
            num_scalar_prefetch=0,
            grid=(num_tiles,),
            in_specs=[
                pl.BlockSpec((tm, d_model), lambda i: (i, 0)),   # x rows
                pl.BlockSpec((d_model, d_ffn), full),            # w1
                pl.BlockSpec((1, d_ffn), full),                  # b1
                pl.BlockSpec((d_ffn, d_half), full),             # w2 (LN1 folded)
                pl.BlockSpec((1, d_half), full),                 # b2 (LN1 folded)
                pl.BlockSpec((1, d_half), full),                 # w3 row (LN2 folded)
                pl.BlockSpec((1, 1), full),                      # b3 (LN2 folded)
            ],
            out_specs=pl.BlockSpec((tm, 1), lambda i: (i, 0)),
        ),
        compiler_params=pltpu.CompilerParams(
            dimension_semantics=("parallel",),        # megacore-split rows on v7x
            vmem_limit_bytes=32 * 1024 * 1024,        # fits v5e/v6e/v7x scoped VMEM
        ),
    )(x2d, w1, b1, w2f, b2f, w3f, b3f)

    return {"imitation_score": out2d[:rows].reshape(B, V, 1)}


def reference_forward(decoder_output, params):
    """Pure-JAX reference of the original (unfolded) module math."""
    x = decoder_output.astype(jnp.float32)
    h = jnp.maximum(x @ params["w1"] + params["b1"], 0.0)
    mu = h.mean(-1, keepdims=True)
    var = ((h - mu) ** 2).mean(-1, keepdims=True)
    h = (h - mu) / jnp.sqrt(var + LN_EPS) * params["g1"] + params["be1"]
    h2 = jnp.maximum(h @ params["w2"] + params["b2"], 0.0)
    mu2 = h2.mean(-1, keepdims=True)
    var2 = ((h2 - mu2) ** 2).mean(-1, keepdims=True)
    h2 = (h2 - mu2) / jnp.sqrt(var2 + LN_EPS) * params["g2"] + params["be2"]
    return (h2 @ params["w3"] + params["b3"]).astype(decoder_output.dtype)


if __name__ == "__main__":
    # Small shapes consistent with the module: batch=2, vocab=8 queries,
    # d_model=32, d_ffn=64 (so d_ffn//2=32).
    B, VOCAB, D_MODEL, D_FFN = 2, 8, 32, 64

    key = jax.random.PRNGKey(0)
    k_x, k_p = jax.random.split(key)
    decoder_output = jax.random.normal(k_x, (B, VOCAB, D_MODEL), jnp.float32)
    params = init_params(k_p, D_MODEL, D_FFN)

    out = imitation_head_forward(decoder_output, params)
    score = jax.block_until_ready(out["imitation_score"])

    ref = reference_forward(decoder_output, params)
    assert score.shape == (B, VOCAB, 1)
    assert jnp.allclose(score[..., 0], ref[..., 0], atol=1e-4, rtol=1e-4)

    print("KERNEL_OK")
</pallas_src>

<mosaic_0001>
module attributes {stable_mosaic.version = 11 : i64} {
  func.func @imitation_head_kernel(%arg0: i32, %arg1: memref<256x32xf32, #tpu.memory_space<vmem>>, %arg2: memref<32x64xf32, #tpu.memory_space<vmem>>, %arg3: memref<1x64xf32, #tpu.memory_space<vmem>>, %arg4: memref<64x32xf32, #tpu.memory_space<vmem>>, %arg5: memref<1x32xf32, #tpu.memory_space<vmem>>, %arg6: memref<1x32xf32, #tpu.memory_space<vmem>>, %arg7: memref<1x1xf32, #tpu.memory_space<vmem>>, %arg8: memref<256x1xf32, #tpu.memory_space<vmem>>) attributes {dimension_semantics = [#tpu.dimension_semantics<parallel>], iteration_bounds = array<i64: 1>, scalar_prefetch = 0 : i64, scratch_operands = 0 : i64, tpu.core_type = #tpu.core_type<tc>, window_params = [{transform_indices = @transform_0, window_bounds = array<i64: 256, 32>}, {pipeline_mode = #tpu.pipeline_mode<synchronous>, transform_indices = @transform_1, window_bounds = array<i64: 32, 64>}, {pipeline_mode = #tpu.pipeline_mode<synchronous>, transform_indices = @transform_2, window_bounds = array<i64: 1, 64>}, {pipeline_mode = #tpu.pipeline_mode<synchronous>, transform_indices = @transform_3, window_bounds = array<i64: 64, 32>}, {pipeline_mode = #tpu.pipeline_mode<synchronous>, transform_indices = @transform_4, window_bounds = array<i64: 1, 32>}, {pipeline_mode = #tpu.pipeline_mode<synchronous>, transform_indices = @transform_5, window_bounds = array<i64: 1, 32>}, {pipeline_mode = #tpu.pipeline_mode<synchronous>, transform_indices = @transform_6, window_bounds = array<i64: 1, 1>}, {transform_indices = @transform_7, window_bounds = array<i64: 256, 1>}]} {
    %c0 = arith.constant 0 : index
    %c0_0 = arith.constant 0 : index
    %0 = vector.load %arg1[%c0, %c0_0] : memref<256x32xf32, #tpu.memory_space<vmem>>, vector<256x32xf32>
    %c0_1 = arith.constant 0 : index
    %c0_2 = arith.constant 0 : index
    %1 = vector.load %arg2[%c0_1, %c0_2] : memref<32x64xf32, #tpu.memory_space<vmem>>, vector<32x64xf32>
    %cst = arith.constant dense<0.000000e+00> : vector<256x64xf32>
    %2 = tpu.matmul %0, %1, %cst {dimension_numbers = #tpu.dot_dimension_numbers<[1], [0], [0], [1], [0, 0, 1, 1], [], []>} : vector<256x32xf32>, vector<32x64xf32>, vector<256x64xf32> -> vector<256x64xf32>
    %c0_3 = arith.constant 0 : index
    %c0_4 = arith.constant 0 : index
    %3 = vector.load %arg3[%c0_3, %c0_4] : memref<1x64xf32, #tpu.memory_space<vmem>>, vector<1x64xf32>
    %4 = vector.broadcast %3 : vector<1x64xf32> to vector<256x64xf32>
    %5 = arith.addf %2, %4 : vector<256x64xf32>
    %cst_5 = arith.constant 0.000000e+00 : f32
    %6 = vector.broadcast %cst_5 : f32 to vector<256x64xf32>
    %7 = arith.maximumf %5, %6 : vector<256x64xf32>
    %cst_6 = arith.constant dense<0.000000e+00> : vector<256xf32>
    %8 = vector.multi_reduction <add>, %7, %cst_6 [1] : vector<256x64xf32> to vector<256xf32>
    %9 = vector.shape_cast %8 : vector<256xf32> to vector<256x1xf32>
    %cst_7 = arith.constant 6.400000e+01 : f32
    %10 = vector.broadcast %cst_7 : f32 to vector<256x1xf32>
    %11 = arith.divf %9, %10 : vector<256x1xf32>
    %12 = vector.broadcast %11 : vector<256x1xf32> to vector<256x64xf32>
    %13 = arith.subf %7, %12 : vector<256x64xf32>
    %14 = arith.mulf %13, %13 : vector<256x64xf32>
    %cst_8 = arith.constant dense<0.000000e+00> : vector<256xf32>
    %15 = vector.multi_reduction <add>, %14, %cst_8 [1] : vector<256x64xf32> to vector<256xf32>
    %16 = vector.shape_cast %15 : vector<256xf32> to vector<256x1xf32>
    %cst_9 = arith.constant 6.400000e+01 : f32
    %17 = vector.broadcast %cst_9 : f32 to vector<256x1xf32>
    %18 = arith.divf %16, %17 : vector<256x1xf32>
    %19 = vector.broadcast %11 : vector<256x1xf32> to vector<256x64xf32>
    %20 = arith.subf %7, %19 : vector<256x64xf32>
    %cst_10 = arith.constant 9.99999974E-6 : f32
    %21 = vector.broadcast %cst_10 : f32 to vector<256x1xf32>
    %22 = arith.addf %18, %21 : vector<256x1xf32>
    %23 = math.rsqrt %22 : vector<256x1xf32>
    %24 = vector.broadcast %23 : vector<256x1xf32> to vector<256x64xf32>
    %25 = arith.mulf %20, %24 : vector<256x64xf32>
    %c0_11 = arith.constant 0 : index
    %c0_12 = arith.constant 0 : index
    %26 = vector.load %arg4[%c0_11, %c0_12] : memref<64x32xf32, #tpu.memory_space<vmem>>, vector<64x32xf32>
    %cst_13 = arith.constant dense<0.000000e+00> : vector<256x32xf32>
    %27 = tpu.matmul %25, %26, %cst_13 {dimension_numbers = #tpu.dot_dimension_numbers<[1], [0], [0], [1], [0, 0, 1, 1], [], []>} : vector<256x64xf32>, vector<64x32xf32>, vector<256x32xf32> -> vector<256x32xf32>
    %c0_14 = arith.constant 0 : index
    %c0_15 = arith.constant 0 : index
    %28 = vector.load %arg5[%c0_14, %c0_15] : memref<1x32xf32, #tpu.memory_space<vmem>>, vector<1x32xf32>
    %29 = vector.broadcast %28 : vector<1x32xf32> to vector<256x32xf32>
    %30 = arith.addf %27, %29 : vector<256x32xf32>
    %cst_16 = arith.constant 0.000000e+00 : f32
    %31 = vector.broadcast %cst_16 : f32 to vector<256x32xf32>
    %32 = arith.maximumf %30, %31 : vector<256x32xf32>
    %cst_17 = arith.constant dense<0.000000e+00> : vector<256xf32>
    %33 = vector.multi_reduction <add>, %32, %cst_17 [1] : vector<256x32xf32> to vector<256xf32>
    %34 = vector.shape_cast %33 : vector<256xf32> to vector<256x1xf32>
    %cst_18 = arith.constant 3.200000e+01 : f32
    %35 = vector.broadcast %cst_18 : f32 to vector<256x1xf32>
    %36 = arith.divf %34, %35 : vector<256x1xf32>
    %37 = vector.broadcast %36 : vector<256x1xf32> to vector<256x32xf32>
    %38 = arith.subf %32, %37 : vector<256x32xf32>
    %39 = arith.mulf %38, %38 : vector<256x32xf32>
    %cst_19 = arith.constant dense<0.000000e+00> : vector<256xf32>
    %40 = vector.multi_reduction <add>, %39, %cst_19 [1] : vector<256x32xf32> to vector<256xf32>
    %41 = vector.shape_cast %40 : vector<256xf32> to vector<256x1xf32>
    %cst_20 = arith.constant 3.200000e+01 : f32
    %42 = vector.broadcast %cst_20 : f32 to vector<256x1xf32>
    %43 = arith.divf %41, %42 : vector<256x1xf32>
    %44 = vector.broadcast %36 : vector<256x1xf32> to vector<256x32xf32>
    %45 = arith.subf %32, %44 : vector<256x32xf32>
    %cst_21 = arith.constant 9.99999974E-6 : f32
    %46 = vector.broadcast %cst_21 : f32 to vector<256x1xf32>
    %47 = arith.addf %43, %46 : vector<256x1xf32>
    %48 = math.rsqrt %47 : vector<256x1xf32>
    %49 = vector.broadcast %48 : vector<256x1xf32> to vector<256x32xf32>
    %50 = arith.mulf %45, %49 : vector<256x32xf32>
    %c0_22 = arith.constant 0 : index
    %c0_23 = arith.constant 0 : index
    %51 = vector.load %arg6[%c0_22, %c0_23] : memref<1x32xf32, #tpu.memory_space<vmem>>, vector<1x32xf32>
    %52 = vector.broadcast %51 : vector<1x32xf32> to vector<256x32xf32>
    %53 = arith.mulf %50, %52 : vector<256x32xf32>
    %cst_24 = arith.constant dense<0.000000e+00> : vector<256xf32>
    %54 = vector.multi_reduction <add>, %53, %cst_24 [1] : vector<256x32xf32> to vector<256xf32>
    %55 = vector.shape_cast %54 : vector<256xf32> to vector<256x1xf32>
    %c0_25 = arith.constant 0 : index
    %c0_26 = arith.constant 0 : index
    %56 = vector.load %arg7[%c0_25, %c0_26] : memref<1x1xf32, #tpu.memory_space<vmem>>, vector<1x1xf32>
    %57 = vector.broadcast %56 : vector<1x1xf32> to vector<256x1xf32>
    %58 = arith.addf %55, %57 : vector<256x1xf32>
    %c0_27 = arith.constant 0 : index
    %c0_28 = arith.constant 0 : index
    %59 = vector.load %arg8[%c0_27, %c0_28] : memref<256x1xf32, #tpu.memory_space<vmem>>, vector<256x1xf32>
    tpu.vector_store %arg8[%c0_27, %c0_28], %58 {strides = array<i32>} : memref<256x1xf32, #tpu.memory_space<vmem>>, vector<256x1xf32>,
    return
  }
  func.func @transform_0(%arg0: i32) -> (i32, i32) {
    %c0_i32 = arith.constant 0 : i32
    %c0_i32_0 = arith.constant 0 : i32
    return %arg0, %c0_i32 : i32, i32
  }
  func.func @transform_1(%arg0: i32) -> (i32, i32) {
    %c0_i32 = arith.constant 0 : i32
    %c0_i32_0 = arith.constant 0 : i32
    %c0_i32_1 = arith.constant 0 : i32
    return %c0_i32, %c0_i32_0 : i32, i32
  }
  func.func @transform_2(%arg0: i32) -> (i32, i32) {
    %c0_i32 = arith.constant 0 : i32
    %c0_i32_0 = arith.constant 0 : i32
    %c0_i32_1 = arith.constant 0 : i32
    return %c0_i32, %c0_i32_0 : i32, i32
  }
  func.func @transform_3(%arg0: i32) -> (i32, i32) {
    %c0_i32 = arith.constant 0 : i32
    %c0_i32_0 = arith.constant 0 : i32
    %c0_i32_1 = arith.constant 0 : i32
    return %c0_i32, %c0_i32_0 : i32, i32
  }
  func.func @transform_4(%arg0: i32) -> (i32, i32) {
    %c0_i32 = arith.constant 0 : i32
    %c0_i32_0 = arith.constant 0 : i32
    %c0_i32_1 = arith.constant 0 : i32
    return %c0_i32, %c0_i32_0 : i32, i32
  }
  func.func @transform_5(%arg0: i32) -> (i32, i32) {
    %c0_i32 = arith.constant 0 : i32
    %c0_i32_0 = arith.constant 0 : i32
    %c0_i32_1 = arith.constant 0 : i32
    return %c0_i32, %c0_i32_0 : i32, i32
  }
  func.func @transform_6(%arg0: i32) -> (i32, i32) {
    %c0_i32 = arith.constant 0 : i32
    %c0_i32_0 = arith.constant 0 : i32
    %c0_i32_1 = arith.constant 0 : i32
    return %c0_i32, %c0_i32_0 : i32, i32
  }
  func.func @transform_7(%arg0: i32) -> (i32, i32) {
    %c0_i32 = arith.constant 0 : i32
    %c0_i32_0 = arith.constant 0 : i32
    return %arg0, %c0_i32 : i32, i32
  }
}

</mosaic_0001>

<llo_original>
// kernel: tpu_custom_call.1
$region0: #{tpu_custom_call.1}
  #allocation0 [shape = 'u32[]', space=smem, size = 0x4, offset = 0x4, fixed_abs, tag = 'smem constant byte address 0x4 - core index']
  #allocation1 [shape = 'u32[144,128]{1,0:T(1,128)}', space=vmem, size = 0x12000, scoped, tag = 'internal scratch']
  #allocation2 [shape = 'f32[1,1]{1,0:T(1,128)S(1)}', space=vmem, size = 0x200, scoped, tag = 'scoped memory for tpu_custom_call.1']
  %s0 = inlined_call_operand.vmem [shape: f32[256,32], index: 0, kind: input, shape index: {}]
  %s1 = inlined_call_operand.vmem [shape: f32[32,64], index: 1, kind: input, shape index: {}]
  %s2 = inlined_call_operand.vmem [shape: f32[1,64], index: 2, kind: input, shape index: {}]
  %s3 = inlined_call_operand.vmem [shape: f32[64,32], index: 3, kind: input, shape index: {}]
  %s4 = inlined_call_operand.vmem [shape: f32[1,32], index: 4, kind: input, shape index: {}]
  %s5 = inlined_call_operand.vmem [shape: f32[1,32], index: 5, kind: input, shape index: {}]
  %s6 = inlined_call_operand.<no memory space> [shape: f32[1,1], index: 6, kind: input, shape index: {}]
  %s7 = inlined_call_operand.vmem [shape: f32[256,1], index: 7, kind: output, shape index: {}]
  %s8 = sld [smem:[#allocation0]]
  $region38: #{tpu_custom_call.1} parent=0
    _
  %s10 = ssub.s32 1, %s8
  %s11 = scalar_select 0, %s10, %s8
  %v12 = vstv %s6
  %13 = vst [vmem:[#allocation2] sm:$0x1] %v12
  // Predicated region
  $region2: #{tpu_custom_call.1} parent=0 // pred_check
    _
  $region3: #{tpu_custom_call.1} parent=0 // pred_check_branch
    %15 = sbr.rel (0) target = $region5
  $region4: #{tpu_custom_call.1} parent=0 // pred_region
    _
  $region5: #{tpu_custom_call.1} parent=0 // pred_fallthru
    _
  // Predicated region
  $region6: #{tpu_custom_call.1} parent=0 // pred_check
    _
  $region7: #{tpu_custom_call.1} parent=0 // pred_check_branch
    %17 = sbr.rel (0) target = $region9
  $region8: #{tpu_custom_call.1} parent=0 // pred_region
    _
  $region9: #{tpu_custom_call.1} parent=0 // pred_fallthru
    _
  // Predicated region
  $region10: #{tpu_custom_call.1} parent=0 // pred_check
    _
  $region11: #{tpu_custom_call.1} parent=0 // pred_check_branch
    %19 = sbr.rel (0) target = $region13
  $region12: #{tpu_custom_call.1} parent=0 // pred_region
    _
  $region13: #{tpu_custom_call.1} parent=0 // pred_fallthru
    _
  // Predicated region
  $region14: #{tpu_custom_call.1} parent=0 // pred_check
    _
  $region15: #{tpu_custom_call.1} parent=0 // pred_check_branch
    %21 = sbr.rel (0) target = $region17
  $region16: #{tpu_custom_call.1} parent=0 // pred_region
    _
  $region17: #{tpu_custom_call.1} parent=0 // pred_fallthru
    _
  // Predicated region
  $region18: #{tpu_custom_call.1} parent=0 // pred_check
    _
  $region19: #{tpu_custom_call.1} parent=0 // pred_check_branch
    %23 = sbr.rel (0) target = $region21
  $region20: #{tpu_custom_call.1} parent=0 // pred_region
    _
  $region21: #{tpu_custom_call.1} parent=0 // pred_fallthru
    _
  // Predicated region
  $region22: #{tpu_custom_call.1} parent=0 // pred_check
    _
  $region23: #{tpu_custom_call.1} parent=0 // pred_check_branch
    %25 = sbr.rel (0) target = $region25
  $region24: #{tpu_custom_call.1} parent=0 // pred_region
    _
  $region25: #{tpu_custom_call.1} parent=0 // pred_fallthru
    _
  // Predicated region
  $region26: #{tpu_custom_call.1} parent=0 // pred_check
    _
  $region27: #{tpu_custom_call.1} parent=0 // pred_check_branch
    %27 = sbr.rel (0) target = $region29
  $region28: #{tpu_custom_call.1} parent=0 // pred_region
    _
  $region29: #{tpu_custom_call.1} parent=0 // pred_fallthru
    _
  %v28 = vld [vmem:[%s0] sm:$0xff]
  %v29 = vld [vmem:[%s0 + $0x8] sm:$0xff]
  %v30 = vld [vmem:[%s0 + $0x10] sm:$0xff]
  %v31 = vld [vmem:[%s0 + $0x18] sm:$0xff]
  %v32 = vld [vmem:[%s0 + $0x20] sm:$0xff]
  %v33 = vld [vmem:[%s0 + $0x28] sm:$0xff]
  %v34 = vld [vmem:[%s0 + $0x30] sm:$0xff]
  %v35 = vld [vmem:[%s0 + $0x38] sm:$0xff]
  %v36 = vld [vmem:[%s0 + $0x40] sm:$0xff]
  %v37 = vld [vmem:[%s0 + $0x48] sm:$0xff]
  %v38 = vld [vmem:[%s0 + $0x50] sm:$0xff]
  %v39 = vld [vmem:[%s0 + $0x58] sm:$0xff]
  %v40 = vld [vmem:[%s0 + $0x60] sm:$0xff]
  %v41 = vld [vmem:[%s0 + $0x68] sm:$0xff]
  %v42 = vld [vmem:[%s0 + $0x70] sm:$0xff]
  %v43 = vld [vmem:[%s0 + $0x78] sm:$0xff]
  %v44 = vld [vmem:[%s0 + $0x80] sm:$0xff]
  %v45 = vld [vmem:[%s0 + $0x88] sm:$0xff]
  %v46 = vld [vmem:[%s0 + $0x90] sm:$0xff]
  %v47 = vld [vmem:[%s0 + $0x98] sm:$0xff]
  %v48 = vld [vmem:[%s0 + $0xa0] sm:$0xff]
  %v49 = vld [vmem:[%s0 + $0xa8] sm:$0xff]
  %v50 = vld [vmem:[%s0 + $0xb0] sm:$0xff]
  %v51 = vld [vmem:[%s0 + $0xb8] sm:$0xff]
  %v52 = vld [vmem:[%s0 + $0xc0] sm:$0xff]
  %v53 = vld [vmem:[%s0 + $0xc8] sm:$0xff]
  %v54 = vld [vmem:[%s0 + $0xd0] sm:$0xff]
  %v55 = vld [vmem:[%s0 + $0xd8] sm:$0xff]
  %v56 = vld [vmem:[%s0 + $0xe0] sm:$0xff]
  %v57 = vld [vmem:[%s0 + $0xe8] sm:$0xff]
  %v58 = vld [vmem:[%s0 + $0xf0] sm:$0xff]
  %v59 = vld [vmem:[%s0 + $0xf8] sm:$0xff]
  %v60 = vld [vmem:[%s1] sm:$0xff]
  %v61 = vld [vmem:[%s1 + $0x8] sm:$0xff]
  %v62 = vld [vmem:[%s1 + $0x10] sm:$0xff]
  %v63 = vld [vmem:[%s1 + $0x18] sm:$0xff]
  %v64 = vld [vmem:[%s2] sm:$0x1]
  %v66 = vlaneseq
  %v67 = vshrl.u32 %v66, 7
  %v68 = vsub.s32 0, %v67
  %v69 = vrot.slane %v64, %v68
  %vm71 = vcmask 261120
  %v73 = vsel %vm71, %v28, 0
  %v76 = vsel %vm71, %v29, 0
  %v79 = vsel %vm71, %v30, 0
  %v82 = vsel %vm71, %v31, 0
  %v85 = vsel %vm71, %v32, 0
  %v88 = vsel %vm71, %v33, 0
  %v91 = vsel %vm71, %v34, 0
  %v94 = vsel %vm71, %v35, 0
  %v97 = vsel %vm71, %v36, 0
  %v100 = vsel %vm71, %v37, 0
  %v103 = vsel %vm71, %v38, 0
  %v106 = vsel %vm71, %v39, 0
  %v109 = vsel %vm71, %v40, 0
  %v112 = vsel %vm71, %v41, 0
  %v115 = vsel %vm71, %v42, 0
  %v118 = vsel %vm71, %v43, 0
  %v121 = vsel %vm71, %v44, 0
  %v124 = vsel %vm71, %v45, 0
  %v127 = vsel %vm71, %v46, 0
  %v130 = vsel %vm71, %v47, 0
  %v133 = vsel %vm71, %v48, 0
  %v136 = vsel %vm71, %v49, 0
  %v139 = vsel %vm71, %v50, 0
  %v142 = vsel %vm71, %v51, 0
  %v145 = vsel %vm71, %v52, 0
  %v148 = vsel %vm71, %v53, 0
  %v151 = vsel %vm71, %v54, 0
  %v154 = vsel %vm71, %v55, 0
  %v157 = vsel %vm71, %v56, 0
  %v160 = vsel %vm71, %v57, 0
  %v163 = vsel %vm71, %v58, 0
  %v166 = vsel %vm71, %v59, 0
  %168 = vmatprep.subr.mxu0 0.0
  %169 = vmatpush1.msra.mxu0 %v60
  %170 = vmatprep.subr.mxu0 0.0
  %171 = vmatpush1.msra.mxu0 %v61
  %172 = vmatprep.subr.mxu0 0.0
  %173 = vmatpush1.msra.mxu0 %v62
  %174 = vmatprep.subr.mxu0 0.0
  %175 = vmatpush1.msra.mxu0 %v63
  %176 = vmatprep.subr.mxu0 0.0
  %177 = vmatpush1.msra.mxu0 0.0
  %178 = vmatprep.subr.mxu0 0.0
  %179 = vmatpush1.msra.mxu0 0.0
  %180 = vmatprep.subr.mxu0 0.0
  %181 = vmatpush1.msra.mxu0 0.0
  %182 = vmatprep.subr.mxu0 0.0
  %183 = vmatpush1.msra.mxu0 0.0
  %184 = vmatprep.subr.mxu0 0.0
  %185 = vmatpush1.msra.mxu0 0.0
  %186 = vmatprep.subr.mxu0 0.0
  %187 = vmatpush1.msra.mxu0 0.0
  %188 = vmatprep.subr.mxu0 0.0
  %189 = vmatpush1.msra.mxu0 0.0
  %190 = vmatprep.subr.mxu0 0.0
  %191 = vmatpush1.msra.mxu0 0.0
  %192 = vmatprep.subr.mxu0 0.0
  %193 = vmatpush1.msra.mxu0 0.0
  %194 = vmatprep.subr.mxu0 0.0
  %195 = vmatpush1.msra.mxu0 0.0
  %196 = vmatprep.subr.mxu0 0.0
  %197 = vmatpush1.msra.mxu0 0.0
  %198 = vmatprep.subr.mxu0 0.0
  %199 = vmatpush1.msra.mxu0 0.0
  %200 = vmatprep.subr.mxu0 0.0
  %201 = vmatpush1.msra.mxu0 0.0
  %202 = vmatprep.subr.mxu0 0.0
  %203 = vmatpush1.msra.mxu0 0.0
  %204 = vmatprep.subr.mxu0 0.0
  %205 = vmatpush1.msra.mxu0 0.0
  %206 = vmatprep.subr.mxu0 0.0
  %207 = vmatpush1.msra.mxu0 0.0
  %208 = vmatprep.subr.mxu0 0.0
  %209 = vmatpush1.msra.mxu0 0.0
  %210 = vmatprep.subr.mxu0 0.0
  %211 = vmatpush1.msra.mxu0 0.0
  %212 = vmatprep.subr.mxu0 0.0
  %213 = vmatpush1.msra.mxu0 0.0
  %214 = vmatprep.subr.mxu0 0.0
  %215 = vmatpush1.msra.mxu0 0.0
  %216 = vmatprep.subr.mxu0 0.0
  %217 = vmatpush1.msra.mxu0 0.0
  %218 = vmatprep.subr.mxu0 0.0
  %219 = vmatpush1.msra.mxu0 0.0
  %220 = vmatprep.subr.mxu0 0.0
  %221 = vmatpush1.msra.mxu0 0.0
  %222 = vmatprep.subr.mxu0 0.0
  %223 = vmatpush1.msra.mxu0 0.0
  %224 = vmatprep.subr.mxu0 0.0
  %225 = vmatpush1.msra.mxu0 0.0
  %226 = vmatprep.subr.mxu0 0.0
  %227 = vmatpush1.msra.mxu0 0.0
  %228 = vmatprep.subr.mxu0 0.0
  %229 = vmatpush1.msra.mxu0 0.0
  %230 = vmatprep.subr.mxu0 0.0
  %231 = vmatpush1.msra.mxu0 0.0
  %232 = vmatprep.mubr.f32.mxu0 0.0
  %233 = vmatmul.mubr.f32.gmra.mrb[0].mxu0 %v73
  %v234 = vpop.f32.mrb[0].mxu0
  %v235 = vadd.f32 %v69, %v234
  %v236 = vpop.f32.mrb[0].mxu0
  %237 = vmatprep.mubr.f32.mxu0 0.0
  %238 = vmatmul.mubr.f32.gmra.mrb[0].mxu0 %v76
  %v239 = vpop.f32.mrb[0].mxu0
  %v240 = vadd.f32 %v69, %v239
  %v241 = vpop.f32.mrb[0].mxu0
  %242 = vmatprep.mubr.f32.mxu0 0.0
  %243 = vmatmul.mubr.f32.gmra.mrb[0].mxu0 %v79
  %v244 = vpop.f32.mrb[0].mxu0
  %v245 = vadd.f32 %v69, %v244
  %v246 = vpop.f32.mrb[0].mxu0
  %247 = vmatprep.mubr.f32.mxu0 0.0
  %248 = vmatmul.mubr.f32.gmra.mrb[0].mxu0 %v82
  %v249 = vpop.f32.mrb[0].mxu0
  %v250 = vadd.f32 %v69, %v249
  %v251 = vpop.f32.mrb[0].mxu0
  %252 = vmatprep.mubr.f32.mxu0 0.0
  %253 = vmatmul.mubr.f32.gmra.mrb[0].mxu0 %v85
  %v254 = vpop.f32.mrb[0].mxu0
  %v255 = vadd.f32 %v69, %v254
  %v256 = vpop.f32.mrb[0].mxu0
  %257 = vmatprep.mubr.f32.mxu0 0.0
  %258 = vmatmul.mubr.f32.gmra.mrb[0].mxu0 %v88
  %v259 = vpop.f32.mrb[0].mxu0
  %v260 = vadd.f32 %v69, %v259
  %v261 = vpop.f32.mrb[0].mxu0
  %262 = vmatprep.mubr.f32.mxu0 0.0
  %263 = vmatmul.mubr.f32.gmra.mrb[0].mxu0 %v91
  %v264 = vpop.f32.mrb[0].mxu0
  %v265 = vadd.f32 %v69, %v264
  %v266 = vpop.f32.mrb[0].mxu0
  %267 = vmatprep.mubr.f32.mxu0 0.0
  %268 = vmatmul.mubr.f32.gmra.mrb[0].mxu0 %v94
  %v269 = vpop.f32.mrb[0].mxu0
  %v270 = vadd.f32 %v69, %v269
  %v271 = vpop.f32.mrb[0].mxu0
  %272 = vmatprep.mubr.f32.mxu0 0.0
  %273 = vmatmul.mubr.f32.gmra.mrb[0].mxu0 %v97
  %v274 = vpop.f32.mrb[0].mxu0
  %v275 = vadd.f32 %v69, %v274
  %v276 = vpop.f32.mrb[0].mxu0
  %277 = vmatprep.mubr.f32.mxu0 0.0
  %278 = vmatmul.mubr.f32.gmra.mrb[0].mxu0 %v100
  %v279 = vpop.f32.mrb[0].mxu0
  %v280 = vadd.f32 %v69, %v279
  %v281 = vpop.f32.mrb[0].mxu0
  %282 = vmatprep.mubr.f32.mxu0 0.0
  %283 = vmatmul.mubr.f32.gmra.mrb[0].mxu0 %v103
  %v284 = vpop.f32.mrb[0].mxu0
  %v285 = vadd.f32 %v69, %v284
  %v286 = vpop.f32.mrb[0].mxu0
  %287 = vmatprep.mubr.f32.mxu0 0.0
  %288 = vmatmul.mubr.f32.gmra.mrb[0].mxu0 %v106
  %v289 = vpop.f32.mrb[0].mxu0
  %v290 = vadd.f32 %v69, %v289
  %v291 = vpop.f32.mrb[0].mxu0
  %292 = vmatprep.mubr.f32.mxu0 0.0
  %293 = vmatmul.mubr.f32.gmra.mrb[0].mxu0 %v109
  %v294 = vpop.f32.mrb[0].mxu0
  %v295 = vadd.f32 %v69, %v294
  %v296 = vpop.f32.mrb[0].mxu0
  %297 = vmatprep.mubr.f32.mxu0 0.0
  %298 = vmatmul.mubr.f32.gmra.mrb[0].mxu0 %v112
  %v299 = vpop.f32.mrb[0].mxu0
  %v300 = vadd.f32 %v69, %v299
  %v301 = vpop.f32.mrb[0].mxu0
  %302 = vmatprep.mubr.f32.mxu0 0.0
  %303 = vmatmul.mubr.f32.gmra.mrb[0].mxu0 %v115
  %v304 = vpop.f32.mrb[0].mxu0
  %v305 = vadd.f32 %v69, %v304
  %v306 = vpop.f32.mrb[0].mxu0
  %307 = vmatprep.mubr.f32.mxu0 0.0
  %308 = vmatmul.mubr.f32.gmra.mrb[0].mxu0 %v118
  %v309 = vpop.f32.mrb[0].mxu0
  %v310 = vadd.f32 %v69, %v309
  %v311 = vpop.f32.mrb[0].mxu0
  %312 = vmatprep.mubr.f32.mxu0 0.0
  %313 = vmatmul.mubr.f32.gmra.mrb[0].mxu0 %v121
  %v314 = vpop.f32.mrb[0].mxu0
  %v315 = vadd.f32 %v69, %v314
  %v316 = vpop.f32.mrb[0].mxu0
  %317 = vmatprep.mubr.f32.mxu0 0.0
  %318 = vmatmul.mubr.f32.gmra.mrb[0].mxu0 %v124
  %v319 = vpop.f32.mrb[0].mxu0
  %v320 = vadd.f32 %v69, %v319
  %v321 = vpop.f32.mrb[0].mxu0
  %322 = vmatprep.mubr.f32.mxu0 0.0
  %323 = vmatmul.mubr.f32.gmra.mrb[0].mxu0 %v127
  %v324 = vpop.f32.mrb[0].mxu0
  %v325 = vadd.f32 %v69, %v324
  %v326 = vpop.f32.mrb[0].mxu0
  %327 = vmatprep.mubr.f32.mxu0 0.0
  %328 = vmatmul.mubr.f32.gmra.mrb[0].mxu0 %v130
  %v329 = vpop.f32.mrb[0].mxu0
  %v330 = vadd.f32 %v69, %v329
  %v331 = vpop.f32.mrb[0].mxu0
  %332 = vmatprep.mubr.f32.mxu0 0.0
  %333 = vmatmul.mubr.f32.gmra.mrb[0].mxu0 %v133
  %v334 = vpop.f32.mrb[0].mxu0
  %v335 = vadd.f32 %v69, %v334
  %v336 = vpop.f32.mrb[0].mxu0
  %337 = vmatprep.mubr.f32.mxu0 0.0
  %338 = vmatmul.mubr.f32.gmra.mrb[0].mxu0 %v136
  %v339 = vpop.f32.mrb[0].mxu0
  %v340 = vadd.f32 %v69, %v339
  %v341 = vpop.f32.mrb[0].mxu0
  %342 = vmatprep.mubr.f32.mxu0 0.0
  %343 = vmatmul.mubr.f32.gmra.mrb[0].mxu0 %v139
  %v344 = vpop.f32.mrb[0].mxu0
  %v345 = vadd.f32 %v69, %v344
  %v346 = vpop.f32.mrb[0].mxu0
  %347 = vmatprep.mubr.f32.mxu0 0.0
  %348 = vmatmul.mubr.f32.gmra.mrb[0].mxu0 %v142
  %v349 = vpop.f32.mrb[0].mxu0
  %v350 = vadd.f32 %v69, %v349
  %v351 = vpop.f32.mrb[0].mxu0
  %352 = vmatprep.mubr.f32.mxu0 0.0
  %353 = vmatmul.mubr.f32.gmra.mrb[0].mxu0 %v145
  %v354 = vpop.f32.mrb[0].mxu0
  %v355 = vadd.f32 %v69, %v354
  %v356 = vpop.f32.mrb[0].mxu0
  %357 = vmatprep.mubr.f32.mxu0 0.0
  %358 = vmatmul.mubr.f32.gmra.mrb[0].mxu0 %v148
  %v359 = vpop.f32.mrb[0].mxu0
  %v360 = vadd.f32 %v69, %v359
  %v361 = vpop.f32.mrb[0].mxu0
  %362 = vmatprep.mubr.f32.mxu0 0.0
  %363 = vmatmul.mubr.f32.gmra.mrb[0].mxu0 %v151
  %v364 = vpop.f32.mrb[0].mxu0
  %v365 = vadd.f32 %v69, %v364
  %v366 = vpop.f32.mrb[0].mxu0
  %367 = vmatprep.mubr.f32.mxu0 0.0
  %368 = vmatmul.mubr.f32.gmra.mrb[0].mxu0 %v154
  %v369 = vpop.f32.mrb[0].mxu0
  %v370 = vadd.f32 %v69, %v369
  %v371 = vpop.f32.mrb[0].mxu0
  %372 = vmatprep.mubr.f32.mxu0 0.0
  %373 = vmatmul.mubr.f32.gmra.mrb[0].mxu0 %v157
  %v374 = vpop.f32.mrb[0].mxu0
  %v375 = vadd.f32 %v69, %v374
  %v376 = vpop.f32.mrb[0].mxu0
  %377 = vmatprep.mubr.f32.mxu0 0.0
  %378 = vmatmul.mubr.f32.gmra.mrb[0].mxu0 %v160
  %v379 = vpop.f32.mrb[0].mxu0
  %v380 = vadd.f32 %v69, %v379
  %v381 = vpop.f32.mrb[0].mxu0
  %382 = vmatprep.mubr.f32.mxu0 0.0
  %383 = vmatmul.mubr.f32.gmra.mrb[0].mxu0 %v163
  %v384 = vpop.f32.mrb[0].mxu0
  %v385 = vadd.f32 %v69, %v384
  %v386 = vpop.f32.mrb[0].mxu0
  %387 = vmatprep.mubr.f32.mxu0 0.0
  %388 = vmatmul.mubr.f32.gmra.mrb[0].mxu0 %v166
  %v389 = vpop.f32.mrb[0].mxu0
  %v390 = vadd.f32 %v69, %v389
  %v391 = vpop.f32.mrb[0].mxu0
  %392 = vdwg.mxu0
  %v393 = vmax.f32 %v235, 0.0
  %v394 = vmax.f32 %v240, 0.0
  %v395 = vmax.f32 %v245, 0.0
  %v396 = vmax.f32 %v250, 0.0
  %v397 = vmax.f32 %v255, 0.0
  %v398 = vmax.f32 %v260, 0.0
  %v399 = vmax.f32 %v265, 0.0
  %v400 = vmax.f32 %v270, 0.0
  %v401 = vmax.f32 %v275, 0.0
  %v402 = vmax.f32 %v280, 0.0
  %v403 = vmax.f32 %v285, 0.0
  %v404 = vmax.f32 %v290, 0.0
  %v405 = vmax.f32 %v295, 0.0
  %v406 = vmax.f32 %v300, 0.0
  %v407 = vmax.f32 %v305, 0.0
  %v408 = vmax.f32 %v310, 0.0
  %v409 = vmax.f32 %v315, 0.0
  %v410 = vmax.f32 %v320, 0.0
  %v411 = vmax.f32 %v325, 0.0
  %v412 = vmax.f32 %v330, 0.0
  %v413 = vmax.f32 %v335, 0.0
  %v414 = vmax.f32 %v340, 0.0
  %v415 = vmax.f32 %v345, 0.0
  %v416 = vmax.f32 %v350, 0.0
  %v417 = vmax.f32 %v355, 0.0
  %v418 = vmax.f32 %v360, 0.0
  %v419 = vmax.f32 %v365, 0.0
  %v420 = vmax.f32 %v370, 0.0
  %v421 = vmax.f32 %v375, 0.0
  %v422 = vmax.f32 %v380, 0.0
  %v423 = vmax.f32 %v385, 0.0
  %v424 = vmax.f32 %v390, 0.0
  %vm425 = vcmask 523264
  %v426 = vsel %vm425, %v393, 0.0
  %427 = vadd.xlane.f32.xlu0 %v426
  %v428 = vpop.xlane.xlu0 %427
  %v429 = vsel %vm425, %v394, 0.0
  %430 = vadd.xlane.f32.xlu0 %v429
  %v431 = vpop.xlane.xlu0 %430
  %v432 = vsel %vm425, %v395, 0.0
  %433 = vadd.xlane.f32.xlu0 %v432
  %v434 = vpop.xlane.xlu0 %433
  %v435 = vsel %vm425, %v396, 0.0
  %436 = vadd.xlane.f32.xlu0 %v435
  %v437 = vpop.xlane.xlu0 %436
  %v438 = vsel %vm425, %v397, 0.0
  %439 = vadd.xlane.f32.xlu0 %v438
  %v440 = vpop.xlane.xlu0 %439
  %v441 = vsel %vm425, %v398, 0.0
  %442 = vadd.xlane.f32.xlu0 %v441
  %v443 = vpop.xlane.xlu0 %442
  %v444 = vsel %vm425, %v399, 0.0
  %445 = vadd.xlane.f32.xlu0 %v444
  %v446 = vpop.xlane.xlu0 %445
  %v447 = vsel %vm425, %v400, 0.0
  %448 = vadd.xlane.f32.xlu0 %v447
  %v449 = vpop.xlane.xlu0 %448
  %v450 = vsel %vm425, %v401, 0.0
  %451 = vadd.xlane.f32.xlu0 %v450
  %v452 = vpop.xlane.xlu0 %451
  %v453 = vsel %vm425, %v402, 0.0
  %454 = vadd.xlane.f32.xlu0 %v453
  %v455 = vpop.xlane.xlu0 %454
  %v456 = vsel %vm425, %v403, 0.0
  %457 = vadd.xlane.f32.xlu0 %v456
  %v458 = vpop.xlane.xlu0 %457
  %v459 = vsel %vm425, %v404, 0.0
  %460 = vadd.xlane.f32.xlu0 %v459
  %v461 = vpop.xlane.xlu0 %460
  %v462 = vsel %vm425, %v405, 0.0
  %463 = vadd.xlane.f32.xlu0 %v462
  %v464 = vpop.xlane.xlu0 %463
  %v465 = vsel %vm425, %v406, 0.0
  %466 = vadd.xlane.f32.xlu0 %v465
  %v467 = vpop.xlane.xlu0 %466
  %v468 = vsel %vm425, %v407, 0.0
  %469 = vadd.xlane.f32.xlu0 %v468
  %v470 = vpop.xlane.xlu0 %469
  %v471 = vsel %vm425, %v408, 0.0
  %472 = vadd.xlane.f32.xlu0 %v471
  %v473 = vpop.xlane.xlu0 %472
  %v474 = vsel %vm425, %v409, 0.0
  %475 = vadd.xlane.f32.xlu0 %v474
  %v476 = vpop.xlane.xlu0 %475
  %v477 = vsel %vm425, %v410, 0.0
  %478 = vadd.xlane.f32.xlu0 %v477
  %v479 = vpop.xlane.xlu0 %478
  %v480 = vsel %vm425, %v411, 0.0
  %481 = vadd.xlane.f32.xlu0 %v480
  %v482 = vpop.xlane.xlu0 %481
  %v483 = vsel %vm425, %v412, 0.0
  %484 = vadd.xlane.f32.xlu0 %v483
  %v485 = vpop.xlane.xlu0 %484
  %v486 = vsel %vm425, %v413, 0.0
  %487 = vadd.xlane.f32.xlu0 %v486
  %v488 = vpop.xlane.xlu0 %487
  %v489 = vsel %vm425, %v414, 0.0
  %490 = vadd.xlane.f32.xlu0 %v489
  %v491 = vpop.xlane.xlu0 %490
  %v492 = vsel %vm425, %v415, 0.0
  %493 = vadd.xlane.f32.xlu0 %v492
  %v494 = vpop.xlane.xlu0 %493
  %v495 = vsel %vm425, %v416, 0.0
  %496 = vadd.xlane.f32.xlu0 %v495
  %v497 = vpop.xlane.xlu0 %496
  %v498 = vsel %vm425, %v417, 0.0
  %499 = vadd.xlane.f32.xlu0 %v498
  %v500 = vpop.xlane.xlu0 %499
  %v501 = vsel %vm425, %v418, 0.0
  %502 = vadd.xlane.f32.xlu0 %v501
  %v503 = vpop.xlane.xlu0 %502
  %v504 = vsel %vm425, %v419, 0.0
  %505 = vadd.xlane.f32.xlu0 %v504
  %v506 = vpop.xlane.xlu0 %505
  %v507 = vsel %vm425, %v420, 0.0
  %508 = vadd.xlane.f32.xlu0 %v507
  %v509 = vpop.xlane.xlu0 %508
  %v510 = vsel %vm425, %v421, 0.0
  %511 = vadd.xlane.f32.xlu0 %v510
  %v512 = vpop.xlane.xlu0 %511
  %v513 = vsel %vm425, %v422, 0.0
  %514 = vadd.xlane.f32.xlu0 %v513
  %v515 = vpop.xlane.xlu0 %514
  %v516 = vsel %vm425, %v423, 0.0
  %517 = vadd.xlane.f32.xlu0 %v516
  %v518 = vpop.xlane.xlu0 %517
  %v519 = vsel %vm425, %v424, 0.0
  %520 = vadd.xlane.f32.xlu0 %v519
  %v521 = vpop.xlane.xlu0 %520
  %v522 = vrcp.pop 64.0
  %v523 = vmul.f32 %v428, %v522
  %v524 = vmul.f32 %v431, %v522
  %v525 = vmul.f32 %v434, %v522
  %v526 = vmul.f32 %v437, %v522
  %v527 = vmul.f32 %v440, %v522
  %v528 = vmul.f32 %v443, %v522
  %v529 = vmul.f32 %v446, %v522
  %v530 = vmul.f32 %v449, %v522
  %v531 = vmul.f32 %v452, %v522
  %v532 = vmul.f32 %v455, %v522
  %v533 = vmul.f32 %v458, %v522
  %v534 = vmul.f32 %v461, %v522
  %v535 = vmul.f32 %v464, %v522
  %v536 = vmul.f32 %v467, %v522
  %v537 = vmul.f32 %v470, %v522
  %v538 = vmul.f32 %v473, %v522
  %v539 = vmul.f32 %v476, %v522
  %v540 = vmul.f32 %v479, %v522
  %v541 = vmul.f32 %v482, %v522
  %v542 = vmul.f32 %v485, %v522
  %v543 = vmul.f32 %v488, %v522
  %v544 = vmul.f32 %v491, %v522
  %v545 = vmul.f32 %v494, %v522
  %v546 = vmul.f32 %v497, %v522
  %v547 = vmul.f32 %v500, %v522
  %v548 = vmul.f32 %v503, %v522
  %v549 = vmul.f32 %v506, %v522
  %v550 = vmul.f32 %v509, %v522
  %v551 = vmul.f32 %v512, %v522
  %v552 = vmul.f32 %v515, %v522
  %v553 = vmul.f32 %v518, %v522
  %v554 = vmul.f32 %v521, %v522
  %v555 = vsub.f32 %v393, %v523
  %v556 = vsub.f32 %v394, %v524
  %v557 = vsub.f32 %v395, %v525
  %v558 = vsub.f32 %v396, %v526
  %v559 = vsub.f32 %v397, %v527
  %v560 = vsub.f32 %v398, %v528
  %v561 = vsub.f32 %v399, %v529
  %v562 = vsub.f32 %v400, %v530
  %v563 = vsub.f32 %v401, %v531
  %v564 = vsub.f32 %v402, %v532
  %v565 = vsub.f32 %v403, %v533
  %v566 = vsub.f32 %v404, %v534
  %v567 = vsub.f32 %v405, %v535
  %v568 = vsub.f32 %v406, %v536
  %v569 = vsub.f32 %v407, %v537
  %v570 = vsub.f32 %v408, %v538
  %v571 = vsub.f32 %v409, %v539
  %v572 = vsub.f32 %v410, %v540
  %v573 = vsub.f32 %v411, %v541
  %v574 = vsub.f32 %v412, %v542
  %v575 = vsub.f32 %v413, %v543
  %v576 = vsub.f32 %v414, %v544
  %v577 = vsub.f32 %v415, %v545
  %v578 = vsub.f32 %v416, %v546
  %v579 = vsub.f32 %v417, %v547
  %v580 = vsub.f32 %v418, %v548
  %v581 = vsub.f32 %v419, %v549
  %v582 = vsub.f32 %v420, %v550
  %v583 = vsub.f32 %v421, %v551
  %v584 = vsub.f32 %v422, %v552
  %v585 = vsub.f32 %v423, %v553
  %v586 = vsub.f32 %v424, %v554
  %v587 = vmul.f32 %v555, %v555
  %v588 = vmul.f32 %v556, %v556
  %v589 = vmul.f32 %v557, %v557
  %v590 = vmul.f32 %v558, %v558
  %v591 = vmul.f32 %v559, %v559
  %v592 = vmul.f32 %v560, %v560
  %v593 = vmul.f32 %v561, %v561
  %v594 = vmul.f32 %v562, %v562
  %v595 = vmul.f32 %v563, %v563
  %v596 = vmul.f32 %v564, %v564
  %v597 = vmul.f32 %v565, %v565
  %v598 = vmul.f32 %v566, %v566
  %v599 = vmul.f32 %v567, %v567
  %v600 = vmul.f32 %v568, %v568
  %v601 = vmul.f32 %v569, %v569
  %v602 = vmul.f32 %v570, %v570
  %v603 = vmul.f32 %v571, %v571
  %v604 = vmul.f32 %v572, %v572
  %v605 = vmul.f32 %v573, %v573
  %v606 = vmul.f32 %v574, %v574
  %v607 = vmul.f32 %v575, %v575
  %v608 = vmul.f32 %v576, %v576
  %v609 = vmul.f32 %v577, %v577
  %v610 = vmul.f32 %v578, %v578
  %v611 = vmul.f32 %v579, %v579
  %v612 = vmul.f32 %v580, %v580
  %v613 = vmul.f32 %v581, %v581
  %v614 = vmul.f32 %v582, %v582
  %v615 = vmul.f32 %v583, %v583
  %v616 = vmul.f32 %v584, %v584
  %v617 = vmul.f32 %v585, %v585
  %v618 = vmul.f32 %v586, %v586
  %v619 = vsel %vm425, %v587, 0.0
  %620 = vadd.xlane.f32.xlu0 %v619
  %v621 = vpop.xlane.xlu0 %620
  %v622 = vsel %vm425, %v588, 0.0
  %623 = vadd.xlane.f32.xlu0 %v622
  %v624 = vpop.xlane.xlu0 %623
  %v625 = vsel %vm425, %v589, 0.0
  %626 = vadd.xlane.f32.xlu0 %v625
  %v627 = vpop.xlane.xlu0 %626
  %v628 = vsel %vm425, %v590, 0.0
  %629 = vadd.xlane.f32.xlu0 %v628
  %v630 = vpop.xlane.xlu0 %629
  %v631 = vsel %vm425, %v591, 0.0
  %632 = vadd.xlane.f32.xlu0 %v631
  %v633 = vpop.xlane.xlu0 %632
  %v634 = vsel %vm425, %v592, 0.0
  %635 = vadd.xlane.f32.xlu0 %v634
  %v636 = vpop.xlane.xlu0 %635
  %v637 = vsel %vm425, %v593, 0.0
  %638 = vadd.xlane.f32.xlu0 %v637
  %v639 = vpop.xlane.xlu0 %638
  %v640 = vsel %vm425, %v594, 0.0
  %641 = vadd.xlane.f32.xlu0 %v640
  %v642 = vpop.xlane.xlu0 %641
  %v643 = vsel %vm425, %v595, 0.0
  %644 = vadd.xlane.f32.xlu0 %v643
  %v645 = vpop.xlane.xlu0 %644
  %v646 = vsel %vm425, %v596, 0.0
  %647 = vadd.xlane.f32.xlu0 %v646
  %v648 = vpop.xlane.xlu0 %647
  %v649 = vsel %vm425, %v597, 0.0
  %650 = vadd.xlane.f32.xlu0 %v649
  %v651 = vpop.xlane.xlu0 %650
  %v652 = vsel %vm425, %v598, 0.0
  %653 = vadd.xlane.f32.xlu0 %v652
  %v654 = vpop.xlane.xlu0 %653
  %v655 = vsel %vm425, %v599, 0.0
  %656 = vadd.xlane.f32.xlu0 %v655
  %v657 = vpop.xlane.xlu0 %656
  %v658 = vsel %vm425, %v600, 0.0
  %659 = vadd.xlane.f32.xlu0 %v658
  %v660 = vpop.xlane.xlu0 %659
  %v661 = vsel %vm425, %v601, 0.0
  %662 = vadd.xlane.f32.xlu0 %v661
  %v663 = vpop.xlane.xlu0 %662
  %v664 = vsel %vm425, %v602, 0.0
  %665 = vadd.xlane.f32.xlu0 %v664
  %v666 = vpop.xlane.xlu0 %665
  %v667 = vsel %vm425, %v603, 0.0
  %668 = vadd.xlane.f32.xlu0 %v667
  %v669 = vpop.xlane.xlu0 %668
  %v670 = vsel %vm425, %v604, 0.0
  %671 = vadd.xlane.f32.xlu0 %v670
  %v672 = vpop.xlane.xlu0 %671
  %v673 = vsel %vm425, %v605, 0.0
  %674 = vadd.xlane.f32.xlu0 %v673
  %v675 = vpop.xlane.xlu0 %674
  %v676 = vsel %vm425, %v606, 0.0
  %677 = vadd.xlane.f32.xlu0 %v676
  %v678 = vpop.xlane.xlu0 %677
  %v679 = vsel %vm425, %v607, 0.0
  %680 = vadd.xlane.f32.xlu0 %v679
  %v681 = vpop.xlane.xlu0 %680
  %v682 = vsel %vm425, %v608, 0.0
  %683 = vadd.xlane.f32.xlu0 %v682
  %v684 = vpop.xlane.xlu0 %683
  %v685 = vsel %vm425, %v609, 0.0
  %686 = vadd.xlane.f32.xlu0 %v685
  %v687 = vpop.xlane.xlu0 %686
  %v688 = vsel %vm425, %v610, 0.0
  %689 = vadd.xlane.f32.xlu0 %v688
  %v690 = vpop.xlane.xlu0 %689
  %v691 = vsel %vm425, %v611, 0.0
  %692 = vadd.xlane.f32.xlu0 %v691
  %v693 = vpop.xlane.xlu0 %692
  %v694 = vsel %vm425, %v612, 0.0
  %695 = vadd.xlane.f32.xlu0 %v694
  %v696 = vpop.xlane.xlu0 %695
  %v697 = vsel %vm425, %v613, 0.0
  %698 = vadd.xlane.f32.xlu0 %v697
  %v699 = vpop.xlane.xlu0 %698
  %v700 = vsel %vm425, %v614, 0.0
  %701 = vadd.xlane.f32.xlu0 %v700
  %v702 = vpop.xlane.xlu0 %701
  %v703 = vsel %vm425, %v615, 0.0
  %704 = vadd.xlane.f32.xlu0 %v703
  %v705 = vpop.xlane.xlu0 %704
  %v706 = vsel %vm425, %v616, 0.0
  %707 = vadd.xlane.f32.xlu0 %v706
  %v708 = vpop.xlane.xlu0 %707
  %v709 = vsel %vm425, %v617, 0.0
  %710 = vadd.xlane.f32.xlu0 %v709
  %v711 = vpop.xlane.xlu0 %710
  %v712 = vsel %vm425, %v618, 0.0
  %713 = vadd.xlane.f32.xlu0 %v712
  %v714 = vpop.xlane.xlu0 %713
  %v715 = vmul.f32 %v621, %v522
  %v716 = vmul.f32 %v624, %v522
  %v717 = vmul.f32 %v627, %v522
  %v718 = vmul.f32 %v630, %v522
  %v719 = vmul.f32 %v633, %v522
  %v720 = vmul.f32 %v636, %v522
  %v721 = vmul.f32 %v639, %v522
  %v722 = vmul.f32 %v642, %v522
  %v723 = vmul.f32 %v645, %v522
  %v724 = vmul.f32 %v648, %v522
  %v725 = vmul.f32 %v651, %v522
  %v726 = vmul.f32 %v654, %v522
  %v727 = vmul.f32 %v657, %v522
  %v728 = vmul.f32 %v660, %v522
  %v729 = vmul.f32 %v663, %v522
  %v730 = vmul.f32 %v666, %v522
  %v731 = vmul.f32 %v669, %v522
  %v732 = vmul.f32 %v672, %v522
  %v733 = vmul.f32 %v675, %v522
  %v734 = vmul.f32 %v678, %v522
  %v735 = vmul.f32 %v681, %v522
  %v736 = vmul.f32 %v684, %v522
  %v737 = vmul.f32 %v687, %v522
  %v738 = vmul.f32 %v690, %v522
  %v739 = vmul.f32 %v693, %v522
  %v740 = vmul.f32 %v696, %v522
  %v741 = vmul.f32 %v699, %v522
  %v742 = vmul.f32 %v702, %v522
  %v743 = vmul.f32 %v705, %v522
  %v744 = vmul.f32 %v708, %v522
  %v745 = vmul.f32 %v711, %v522
  %v746 = vmul.f32 %v714, %v522
  %v747 = vadd.f32 %v715, 1e-05
  %v748 = vadd.f32 %v716, 1e-05
  %v749 = vadd.f32 %v717, 1e-05
  %v750 = vadd.f32 %v718, 1e-05
  %v751 = vadd.f32 %v719, 1e-05
  %v752 = vadd.f32 %v720, 1e-05
  %v753 = vadd.f32 %v721, 1e-05
  %v754 = vadd.f32 %v722, 1e-05
  %v755 = vadd.f32 %v723, 1e-05
  %v756 = vadd.f32 %v724, 1e-05
  %v757 = vadd.f32 %v725, 1e-05
  %v758 = vadd.f32 %v726, 1e-05
  %v759 = vadd.f32 %v727, 1e-05
  %v760 = vadd.f32 %v728, 1e-05
  %v761 = vadd.f32 %v729, 1e-05
  %v762 = vadd.f32 %v730, 1e-05
  %v763 = vadd.f32 %v731, 1e-05
  %v764 = vadd.f32 %v732, 1e-05
  %v765 = vadd.f32 %v733, 1e-05
  %v766 = vadd.f32 %v734, 1e-05
  %v767 = vadd.f32 %v735, 1e-05
  %v768 = vadd.f32 %v736, 1e-05
  %v769 = vadd.f32 %v737, 1e-05
  %v770 = vadd.f32 %v738, 1e-05
  %v771 = vadd.f32 %v739, 1e-05
  %v772 = vadd.f32 %v740, 1e-05
  %v773 = vadd.f32 %v741, 1e-05
  %v774 = vadd.f32 %v742, 1e-05
  %v775 = vadd.f32 %v743, 1e-05
  %v776 = vadd.f32 %v744, 1e-05
  %v777 = vadd.f32 %v745, 1e-05
  %v778 = vadd.f32 %v746, 1e-05
  %v779 = vrsqrt.pop %v747
  %v780 = vrsqrt.pop %v748
  %v781 = vrsqrt.pop %v749
  %v782 = vrsqrt.pop %v750
  %v783 = vrsqrt.pop %v751
  %v784 = vrsqrt.pop %v752
  %v785 = vrsqrt.pop %v753
  %v786 = vrsqrt.pop %v754
  %v787 = vrsqrt.pop %v755
  %v788 = vrsqrt.pop %v756
  %v789 = vrsqrt.pop %v757
  %v790 = vrsqrt.pop %v758
  %v791 = vrsqrt.pop %v759
  %v792 = vrsqrt.pop %v760
  %v793 = vrsqrt.pop %v761
  %v794 = vrsqrt.pop %v762
  %v795 = vrsqrt.pop %v763
  %v796 = vrsqrt.pop %v764
  %v797 = vrsqrt.pop %v765
  %v798 = vrsqrt.pop %v766
  %v799 = vrsqrt.pop %v767
  %v800 = vrsqrt.pop %v768
  %v801 = vrsqrt.pop %v769
  %v802 = vrsqrt.pop %v770
  %v803 = vrsqrt.pop %v771
  %v804 = vrsqrt.pop %v772
  %v805 = vrsqrt.pop %v773
  %v806 = vrsqrt.pop %v774
  %v807 = vrsqrt.pop %v775
  %v808 = vrsqrt.pop %v776
  %v809 = vrsqrt.pop %v777
  %v810 = vrsqrt.pop %v778
  %v811 = vmul.f32 %v555, %v779
  %v812 = vmul.f32 %v556, %v780
  %v813 = vmul.f32 %v557, %v781
  %v814 = vmul.f32 %v558, %v782
  %v815 = vmul.f32 %v559, %v783
  %v816 = vmul.f32 %v560, %v784
  %v817 = vmul.f32 %v561, %v785
  %v818 = vmul.f32 %v562, %v786
  %v819 = vmul.f32 %v563, %v787
  %v820 = vmul.f32 %v564, %v788
  %v821 = vmul.f32 %v565, %v789
  %v822 = vmul.f32 %v566, %v790
  %v823 = vmul.f32 %v567, %v791
  %v824 = vmul.f32 %v568, %v792
  %v825 = vmul.f32 %v569, %v793
  %v826 = vmul.f32 %v570, %v794
  %v827 = vmul.f32 %v571, %v795
  %v828 = vmul.f32 %v572, %v796
  %v829 = vmul.f32 %v573, %v797
  %v830 = vmul.f32 %v574, %v798
  %v831 = vmul.f32 %v575, %v799
  %v832 = vmul.f32 %v576, %v800
  %v833 = vmul.f32 %v577, %v801
  %v834 = vmul.f32 %v578, %v802
  %v835 = vmul.f32 %v579, %v803
  %v836 = vmul.f32 %v580, %v804
  %v837 = vmul.f32 %v581, %v805
  %v838 = vmul.f32 %v582, %v806
  %v839 = vmul.f32 %v583, %v807
  %v840 = vmul.f32 %v584, %v808
  %v841 = vmul.f32 %v585, %v809
  %v842 = vmul.f32 %v586, %v810
  %v843 = vld [vmem:[%s3] sm:$0xff]
  %v844 = vld [vmem:[%s3 + $0x8] sm:$0xff]
  %v845 = vld [vmem:[%s3 + $0x10] sm:$0xff]
  %v846 = vld [vmem:[%s3 + $0x18] sm:$0xff]
  %v847 = vld [vmem:[%s3 + $0x20] sm:$0xff]
  %v848 = vld [vmem:[%s3 + $0x28] sm:$0xff]
  %v849 = vld [vmem:[%s3 + $0x30] sm:$0xff]
  %v850 = vld [vmem:[%s3 + $0x38] sm:$0xff]
  %v851 = vld [vmem:[%s4] sm:$0x1]
  %v853 = vlaneseq
  %v854 = vshrl.u32 %v853, 7
  %v855 = vsub.s32 0, %v854
  %v856 = vrot.slane %v851, %v855
  %v859 = vsel %vm425, %v811, 0
  %v862 = vsel %vm425, %v812, 0
  %v865 = vsel %vm425, %v813, 0
  %v868 = vsel %vm425, %v814, 0
  %v871 = vsel %vm425, %v815, 0
  %v874 = vsel %vm425, %v816, 0
  %v877 = vsel %vm425, %v817, 0
  %v880 = vsel %vm425, %v818, 0
  %v883 = vsel %vm425, %v819, 0
  %v886 = vsel %vm425, %v820, 0
  %v889 = vsel %vm425, %v821, 0
  %v892 = vsel %vm425, %v822, 0
  %v895 = vsel %vm425, %v823, 0
  %v898 = vsel %vm425, %v824, 0
  %v901 = vsel %vm425, %v825, 0
  %v904 = vsel %vm425, %v826, 0
  %v907 = vsel %vm425, %v827, 0
  %v910 = vsel %vm425, %v828, 0
  %v913 = vsel %vm425, %v829, 0
  %v916 = vsel %vm425, %v830, 0
  %v919 = vsel %vm425, %v831, 0
  %v922 = vsel %vm425, %v832, 0
  %v925 = vsel %vm425, %v833, 0
  %v928 = vsel %vm425, %v834, 0
  %v931 = vsel %vm425, %v835, 0
  %v934 = vsel %vm425, %v836, 0
  %v937 = vsel %vm425, %v837, 0
  %v940 = vsel %vm425, %v838, 0
  %v943 = vsel %vm425, %v839, 0
  %v946 = vsel %vm425, %v840, 0
  %v949 = vsel %vm425, %v841, 0
  %v952 = vsel %vm425, %v842, 0
  %954 = vmatprep.subr.mxu0 0.0
  %955 = vmatpush1.msra.mxu0 %v843
  %956 = vmatprep.subr.mxu0 0.0
  %957 = vmatpush1.msra.mxu0 %v844
  %958 = vmatprep.subr.mxu0 0.0
  %959 = vmatpush1.msra.mxu0 %v845
  %960 = vmatprep.subr.mxu0 0.0
  %961 = vmatpush1.msra.mxu0 %v846
  %962 = vmatprep.subr.mxu0 0.0
  %963 = vmatpush1.msra.mxu0 %v847
  %964 = vmatprep.subr.mxu0 0.0
  %965 = vmatpush1.msra.mxu0 %v848
  %966 = vmatprep.subr.mxu0 0.0
  %967 = vmatpush1.msra.mxu0 %v849
  %968 = vmatprep.subr.mxu0 0.0
  %969 = vmatpush1.msra.mxu0 %v850
  %970 = vmatprep.subr.mxu0 0.0
  %971 = vmatpush1.msra.mxu0 0.0
  %972 = vmatprep.subr.mxu0 0.0
  %973 = vmatpush1.msra.mxu0 0.0
  %974 = vmatprep.subr.mxu0 0.0
  %975 = vmatpush1.msra.mxu0 0.0
  %976 = vmatprep.subr.mxu0 0.0
  %977 = vmatpush1.msra.mxu0 0.0
  %978 = vmatprep.subr.mxu0 0.0
  %979 = vmatpush1.msra.mxu0 0.0
  %980 = vmatprep.subr.mxu0 0.0
  %981 = vmatpush1.msra.mxu0 0.0
  %982 = vmatprep.subr.mxu0 0.0
  %983 = vmatpush1.msra.mxu0 0.0
  %984 = vmatprep.subr.mxu0 0.0
  %985 = vmatpush1.msra.mxu0 0.0
  %986 = vmatprep.subr.mxu0 0.0
  %987 = vmatpush1.msra.mxu0 0.0
  %988 = vmatprep.subr.mxu0 0.0
  %989 = vmatpush1.msra.mxu0 0.0
  %990 = vmatprep.subr.mxu0 0.0
  %991 = vmatpush1.msra.mxu0 0.0
  %992 = vmatprep.subr.mxu0 0.0
  %993 = vmatpush1.msra.mxu0 0.0
  %994 = vmatprep.subr.mxu0 0.0
  %995 = vmatpush1.msra.mxu0 0.0
  %996 = vmatprep.subr.mxu0 0.0
  %997 = vmatpush1.msra.mxu0 0.0
  %998 = vmatprep.subr.mxu0 0.0
  %999 = vmatpush1.msra.mxu0 0.0
  %1000 = vmatprep.subr.mxu0 0.0
  %1001 = vmatpush1.msra.mxu0 0.0
  %1002 = vmatprep.subr.mxu0 0.0
  %1003 = vmatpush1.msra.mxu0 0.0
  %1004 = vmatprep.subr.mxu0 0.0
  %1005 = vmatpush1.msra.mxu0 0.0
  %1006 = vmatprep.subr.mxu0 0.0
  %1007 = vmatpush1.msra.mxu0 0.0
  %1008 = vmatprep.subr.mxu0 0.0
  %1009 = vmatpush1.msra.mxu0 0.0
  %1010 = vmatprep.subr.mxu0 0.0
  %1011 = vmatpush1.msra.mxu0 0.0
  %1012 = vmatprep.subr.mxu0 0.0
  %1013 = vmatpush1.msra.mxu0 0.0
  %1014 = vmatprep.subr.mxu0 0.0
  %1015 = vmatpush1.msra.mxu0 0.0
  %1016 = vmatprep.subr.mxu0 0.0
  %1017 = vmatpush1.msra.mxu0 0.0
  %1018 = vmatprep.mubr.f32.mxu0 0.0
  %1019 = vmatmul.mubr.f32.gmra.mrb[0].mxu0 %v859
  %v1020 = vpop.f32.mrb[0].mxu0
  %v1021 = vadd.f32 %v856, %v1020
  %v1022 = vpop.f32.mrb[0].mxu0
  %1023 = vmatprep.mubr.f32.mxu0 0.0
  %1024 = vmatmul.mubr.f32.gmra.mrb[0].mxu0 %v862
  %v1025 = vpop.f32.mrb[0].mxu0
  %v1026 = vadd.f32 %v856, %v1025
  %v1027 = vpop.f32.mrb[0].mxu0
  %1028 = vmatprep.mubr.f32.mxu0 0.0
  %1029 = vmatmul.mubr.f32.gmra.mrb[0].mxu0 %v865
  %v1030 = vpop.f32.mrb[0].mxu0
  %v1031 = vadd.f32 %v856, %v1030
  %v1032 = vpop.f32.mrb[0].mxu0
  %1033 = vmatprep.mubr.f32.mxu0 0.0
  %1034 = vmatmul.mubr.f32.gmra.mrb[0].mxu0 %v868
  %v1035 = vpop.f32.mrb[0].mxu0
  %v1036 = vadd.f32 %v856, %v1035
  %v1037 = vpop.f32.mrb[0].mxu0
  %1038 = vmatprep.mubr.f32.mxu0 0.0
  %1039 = vmatmul.mubr.f32.gmra.mrb[0].mxu0 %v871
  %v1040 = vpop.f32.mrb[0].mxu0
  %v1041 = vadd.f32 %v856, %v1040
  %v1042 = vpop.f32.mrb[0].mxu0
  %1043 = vmatprep.mubr.f32.mxu0 0.0
  %1044 = vmatmul.mubr.f32.gmra.mrb[0].mxu0 %v874
  %v1045 = vpop.f32.mrb[0].mxu0
  %v1046 = vadd.f32 %v856, %v1045
  %v1047 = vpop.f32.mrb[0].mxu0
  %1048 = vmatprep.mubr.f32.mxu0 0.0
  %1049 = vmatmul.mubr.f32.gmra.mrb[0].mxu0 %v877
  %v1050 = vpop.f32.mrb[0].mxu0
  %v1051 = vadd.f32 %v856, %v1050
  %v1052 = vpop.f32.mrb[0].mxu0
  %1053 = vmatprep.mubr.f32.mxu0 0.0
  %1054 = vmatmul.mubr.f32.gmra.mrb[0].mxu0 %v880
  %v1055 = vpop.f32.mrb[0].mxu0
  %v1056 = vadd.f32 %v856, %v1055
  %v1057 = vpop.f32.mrb[0].mxu0
  %1058 = vmatprep.mubr.f32.mxu0 0.0
  %1059 = vmatmul.mubr.f32.gmra.mrb[0].mxu0 %v883
  %v1060 = vpop.f32.mrb[0].mxu0
  %v1061 = vadd.f32 %v856, %v1060
  %v1062 = vpop.f32.mrb[0].mxu0
  %1063 = vmatprep.mubr.f32.mxu0 0.0
  %1064 = vmatmul.mubr.f32.gmra.mrb[0].mxu0 %v886
  %v1065 = vpop.f32.mrb[0].mxu0
  %v1066 = vadd.f32 %v856, %v1065
  %v1067 = vpop.f32.mrb[0].mxu0
  %1068 = vmatprep.mubr.f32.mxu0 0.0
  %1069 = vmatmul.mubr.f32.gmra.mrb[0].mxu0 %v889
  %v1070 = vpop.f32.mrb[0].mxu0
  %v1071 = vadd.f32 %v856, %v1070
  %v1072 = vpop.f32.mrb[0].mxu0
  %1073 = vmatprep.mubr.f32.mxu0 0.0
  %1074 = vmatmul.mubr.f32.gmra.mrb[0].mxu0 %v892
  %v1075 = vpop.f32.mrb[0].mxu0
  %v1076 = vadd.f32 %v856, %v1075
  %v1077 = vpop.f32.mrb[0].mxu0
  %1078 = vmatprep.mubr.f32.mxu0 0.0
  %1079 = vmatmul.mubr.f32.gmra.mrb[0].mxu0 %v895
  %v1080 = vpop.f32.mrb[0].mxu0
  %v1081 = vadd.f32 %v856, %v1080
  %v1082 = vpop.f32.mrb[0].mxu0
  %1083 = vmatprep.mubr.f32.mxu0 0.0
  %1084 = vmatmul.mubr.f32.gmra.mrb[0].mxu0 %v898
  %v1085 = vpop.f32.mrb[0].mxu0
  %v1086 = vadd.f32 %v856, %v1085
  %v1087 = vpop.f32.mrb[0].mxu0
  %1088 = vmatprep.mubr.f32.mxu0 0.0
  %1089 = vmatmul.mubr.f32.gmra.mrb[0].mxu0 %v901
  %v1090 = vpop.f32.mrb[0].mxu0
  %v1091 = vadd.f32 %v856, %v1090
  %v1092 = vpop.f32.mrb[0].mxu0
  %1093 = vmatprep.mubr.f32.mxu0 0.0
  %1094 = vmatmul.mubr.f32.gmra.mrb[0].mxu0 %v904
  %v1095 = vpop.f32.mrb[0].mxu0
  %v1096 = vadd.f32 %v856, %v1095
  %v1097 = vpop.f32.mrb[0].mxu0
  %1098 = vmatprep.mubr.f32.mxu0 0.0
  %1099 = vmatmul.mubr.f32.gmra.mrb[0].mxu0 %v907
  %v1100 = vpop.f32.mrb[0].mxu0
  %v1101 = vadd.f32 %v856, %v1100
  %v1102 = vpop.f32.mrb[0].mxu0
  %1103 = vmatprep.mubr.f32.mxu0 0.0
  %1104 = vmatmul.mubr.f32.gmra.mrb[0].mxu0 %v910
  %v1105 = vpop.f32.mrb[0].mxu0
  %v1106 = vadd.f32 %v856, %v1105
  %v1107 = vpop.f32.mrb[0].mxu0
  %1108 = vmatprep.mubr.f32.mxu0 0.0
  %1109 = vmatmul.mubr.f32.gmra.mrb[0].mxu0 %v913
  %v1110 = vpop.f32.mrb[0].mxu0
  %v1111 = vadd.f32 %v856, %v1110
  %v1112 = vpop.f32.mrb[0].mxu0
  %1113 = vmatprep.mubr.f32.mxu0 0.0
  %1114 = vmatmul.mubr.f32.gmra.mrb[0].mxu0 %v916
  %v1115 = vpop.f32.mrb[0].mxu0
  %v1116 = vadd.f32 %v856, %v1115
  %v1117 = vpop.f32.mrb[0].mxu0
  %1118 = vmatprep.mubr.f32.mxu0 0.0
  %1119 = vmatmul.mubr.f32.gmra.mrb[0].mxu0 %v919
  %v1120 = vpop.f32.mrb[0].mxu0
  %v1121 = vadd.f32 %v856, %v1120
  %v1122 = vpop.f32.mrb[0].mxu0
  %1123 = vmatprep.mubr.f32.mxu0 0.0
  %1124 = vmatmul.mubr.f32.gmra.mrb[0].mxu0 %v922
  %v1125 = vpop.f32.mrb[0].mxu0
  %v1126 = vadd.f32 %v856, %v1125
  %v1127 = vpop.f32.mrb[0].mxu0
  %1128 = vmatprep.mubr.f32.mxu0 0.0
  %1129 = vmatmul.mubr.f32.gmra.mrb[0].mxu0 %v925
  %v1130 = vpop.f32.mrb[0].mxu0
  %v1131 = vadd.f32 %v856, %v1130
  %v1132 = vpop.f32.mrb[0].mxu0
  %1133 = vmatprep.mubr.f32.mxu0 0.0
  %1134 = vmatmul.mubr.f32.gmra.mrb[0].mxu0 %v928
  %v1135 = vpop.f32.mrb[0].mxu0
  %v1136 = vadd.f32 %v856, %v1135
  %v1137 = vpop.f32.mrb[0].mxu0
  %1138 = vmatprep.mubr.f32.mxu0 0.0
  %1139 = vmatmul.mubr.f32.gmra.mrb[0].mxu0 %v931
  %v1140 = vpop.f32.mrb[0].mxu0
  %v1141 = vadd.f32 %v856, %v1140
  %v1142 = vpop.f32.mrb[0].mxu0
  %1143 = vmatprep.mubr.f32.mxu0 0.0
  %1144 = vmatmul.mubr.f32.gmra.mrb[0].mxu0 %v934
  %v1145 = vpop.f32.mrb[0].mxu0
  %v1146 = vadd.f32 %v856, %v1145
  %v1147 = vpop.f32.mrb[0].mxu0
  %1148 = vmatprep.mubr.f32.mxu0 0.0
  %1149 = vmatmul.mubr.f32.gmra.mrb[0].mxu0 %v937
  %v1150 = vpop.f32.mrb[0].mxu0
  %v1151 = vadd.f32 %v856, %v1150
  %v1152 = vpop.f32.mrb[0].mxu0
  %1153 = vmatprep.mubr.f32.mxu0 0.0
  %1154 = vmatmul.mubr.f32.gmra.mrb[0].mxu0 %v940
  %v1155 = vpop.f32.mrb[0].mxu0
  %v1156 = vadd.f32 %v856, %v1155
  %v1157 = vpop.f32.mrb[0].mxu0
  %1158 = vmatprep.mubr.f32.mxu0 0.0
  %1159 = vmatmul.mubr.f32.gmra.mrb[0].mxu0 %v943
  %v1160 = vpop.f32.mrb[0].mxu0
  %v1161 = vadd.f32 %v856, %v1160
  %v1162 = vpop.f32.mrb[0].mxu0
  %1163 = vmatprep.mubr.f32.mxu0 0.0
  %1164 = vmatmul.mubr.f32.gmra.mrb[0].mxu0 %v946
  %v1165 = vpop.f32.mrb[0].mxu0
  %v1166 = vadd.f32 %v856, %v1165
  %v1167 = vpop.f32.mrb[0].mxu0
  %1168 = vmatprep.mubr.f32.mxu0 0.0
  %1169 = vmatmul.mubr.f32.gmra.mrb[0].mxu0 %v949
  %v1170 = vpop.f32.mrb[0].mxu0
  %v1171 = vadd.f32 %v856, %v1170
  %v1172 = vpop.f32.mrb[0].mxu0
  %1173 = vmatprep.mubr.f32.mxu0 0.0
  %1174 = vmatmul.mubr.f32.gmra.mrb[0].mxu0 %v952
  %v1175 = vpop.f32.mrb[0].mxu0
  %v1176 = vadd.f32 %v856, %v1175
  %v1177 = vpop.f32.mrb[0].mxu0
  %1178 = vdwg.mxu0
  %v1179 = vmax.f32 %v1021, 0.0
  %v1180 = vmax.f32 %v1026, 0.0
  %v1181 = vmax.f32 %v1031, 0.0
  %v1182 = vmax.f32 %v1036, 0.0
  %v1183 = vmax.f32 %v1041, 0.0
  %v1184 = vmax.f32 %v1046, 0.0
  %v1185 = vmax.f32 %v1051, 0.0
  %v1186 = vmax.f32 %v1056, 0.0
  %v1187 = vmax.f32 %v1061, 0.0
  %v1188 = vmax.f32 %v1066, 0.0
  %v1189 = vmax.f32 %v1071, 0.0
  %v1190 = vmax.f32 %v1076, 0.0
  %v1191 = vmax.f32 %v1081, 0.0
  %v1192 = vmax.f32 %v1086, 0.0
  %v1193 = vmax.f32 %v1091, 0.0
  %v1194 = vmax.f32 %v1096, 0.0
  %v1195 = vmax.f32 %v1101, 0.0
  %v1196 = vmax.f32 %v1106, 0.0
  %v1197 = vmax.f32 %v1111, 0.0
  %v1198 = vmax.f32 %v1116, 0.0
  %v1199 = vmax.f32 %v1121, 0.0
  %v1200 = vmax.f32 %v1126, 0.0
  %v1201 = vmax.f32 %v1131, 0.0
  %v1202 = vmax.f32 %v1136, 0.0
  %v1203 = vmax.f32 %v1141, 0.0
  %v1204 = vmax.f32 %v1146, 0.0
  %v1205 = vmax.f32 %v1151, 0.0
  %v1206 = vmax.f32 %v1156, 0.0
  %v1207 = vmax.f32 %v1161, 0.0
  %v1208 = vmax.f32 %v1166, 0.0
  %v1209 = vmax.f32 %v1171, 0.0
  %v1210 = vmax.f32 %v1176, 0.0
  %v1211 = vsel %vm71, %v1179, 0.0
  %1212 = vadd.xlane.f32.xlu0 %v1211
  %v1213 = vpop.xlane.xlu0 %1212
  %v1214 = vsel %vm71, %v1180, 0.0
  %1215 = vadd.xlane.f32.xlu0 %v1214
  %v1216 = vpop.xlane.xlu0 %1215
  %v1217 = vsel %vm71, %v1181, 0.0
  %1218 = vadd.xlane.f32.xlu0 %v1217
  %v1219 = vpop.xlane.xlu0 %1218
  %v1220 = vsel %vm71, %v1182, 0.0
  %1221 = vadd.xlane.f32.xlu0 %v1220
  %v1222 = vpop.xlane.xlu0 %1221
  %v1223 = vsel %vm71, %v1183, 0.0
  %1224 = vadd.xlane.f32.xlu0 %v1223
  %v1225 = vpop.xlane.xlu0 %1224
  %v1226 = vsel %vm71, %v1184, 0.0
  %1227 = vadd.xlane.f32.xlu0 %v1226
  %v1228 = vpop.xlane.xlu0 %1227
  %v1229 = vsel %vm71, %v1185, 0.0
  %1230 = vadd.xlane.f32.xlu0 %v1229
  %v1231 = vpop.xlane.xlu0 %1230
  %v1232 = vsel %vm71, %v1186, 0.0
  %1233 = vadd.xlane.f32.xlu0 %v1232
  %v1234 = vpop.xlane.xlu0 %1233
  %v1235 = vsel %vm71, %v1187, 0.0
  %1236 = vadd.xlane.f32.xlu0 %v1235
  %v1237 = vpop.xlane.xlu0 %1236
  %v1238 = vsel %vm71, %v1188, 0.0
  %1239 = vadd.xlane.f32.xlu0 %v1238
  %v1240 = vpop.xlane.xlu0 %1239
  %v1241 = vsel %vm71, %v1189, 0.0
  %1242 = vadd.xlane.f32.xlu0 %v1241
  %v1243 = vpop.xlane.xlu0 %1242
  %v1244 = vsel %vm71, %v1190, 0.0
  %1245 = vadd.xlane.f32.xlu0 %v1244
  %v1246 = vpop.xlane.xlu0 %1245
  %v1247 = vsel %vm71, %v1191, 0.0
  %1248 = vadd.xlane.f32.xlu0 %v1247
  %v1249 = vpop.xlane.xlu0 %1248
  %v1250 = vsel %vm71, %v1192, 0.0
  %1251 = vadd.xlane.f32.xlu0 %v1250
  %v1252 = vpop.xlane.xlu0 %1251
  %v1253 = vsel %vm71, %v1193, 0.0
  %1254 = vadd.xlane.f32.xlu0 %v1253
  %v1255 = vpop.xlane.xlu0 %1254
  %v1256 = vsel %vm71, %v1194, 0.0
  %1257 = vadd.xlane.f32.xlu0 %v1256
  %v1258 = vpop.xlane.xlu0 %1257
  %v1259 = vsel %vm71, %v1195, 0.0
  %1260 = vadd.xlane.f32.xlu0 %v1259
  %v1261 = vpop.xlane.xlu0 %1260
  %v1262 = vsel %vm71, %v1196, 0.0
  %1263 = vadd.xlane.f32.xlu0 %v1262
  %v1264 = vpop.xlane.xlu0 %1263
  %v1265 = vsel %vm71, %v1197, 0.0
  %1266 = vadd.xlane.f32.xlu0 %v1265
  %v1267 = vpop.xlane.xlu0 %1266
  %v1268 = vsel %vm71, %v1198, 0.0
  %1269 = vadd.xlane.f32.xlu0 %v1268
  %v1270 = vpop.xlane.xlu0 %1269
  %v1271 = vsel %vm71, %v1199, 0.0
  %1272 = vadd.xlane.f32.xlu0 %v1271
  %v1273 = vpop.xlane.xlu0 %1272
  %v1274 = vsel %vm71, %v1200, 0.0
  %1275 = vadd.xlane.f32.xlu0 %v1274
  %v1276 = vpop.xlane.xlu0 %1275
  %v1277 = vsel %vm71, %v1201, 0.0
  %1278 = vadd.xlane.f32.xlu0 %v1277
  %v1279 = vpop.xlane.xlu0 %1278
  %v1280 = vsel %vm71, %v1202, 0.0
  %1281 = vadd.xlane.f32.xlu0 %v1280
  %v1282 = vpop.xlane.xlu0 %1281
  %v1283 = vsel %vm71, %v1203, 0.0
  %1284 = vadd.xlane.f32.xlu0 %v1283
  %v1285 = vpop.xlane.xlu0 %1284
  %v1286 = vsel %vm71, %v1204, 0.0
  %1287 = vadd.xlane.f32.xlu0 %v1286
  %v1288 = vpop.xlane.xlu0 %1287
  %v1289 = vsel %vm71, %v1205, 0.0
  %1290 = vadd.xlane.f32.xlu0 %v1289
  %v1291 = vpop.xlane.xlu0 %1290
  %v1292 = vsel %vm71, %v1206, 0.0
  %1293 = vadd.xlane.f32.xlu0 %v1292
  %v1294 = vpop.xlane.xlu0 %1293
  %v1295 = vsel %vm71, %v1207, 0.0
  %1296 = vadd.xlane.f32.xlu0 %v1295
  %v1297 = vpop.xlane.xlu0 %1296
  %v1298 = vsel %vm71, %v1208, 0.0
  %1299 = vadd.xlane.f32.xlu0 %v1298
  %v1300 = vpop.xlane.xlu0 %1299
  %v1301 = vsel %vm71, %v1209, 0.0
  %1302 = vadd.xlane.f32.xlu0 %v1301
  %v1303 = vpop.xlane.xlu0 %1302
  %v1304 = vsel %vm71, %v1210, 0.0
  %1305 = vadd.xlane.f32.xlu0 %v1304
  %v1306 = vpop.xlane.xlu0 %1305
  %v1307 = vrcp.pop 32.0
  %v1308 = vmul.f32 %v1213, %v1307
  %v1309 = vmul.f32 %v1216, %v1307
  %v1310 = vmul.f32 %v1219, %v1307
  %v1311 = vmul.f32 %v1222, %v1307
  %v1312 = vmul.f32 %v1225, %v1307
  %v1313 = vmul.f32 %v1228, %v1307
  %v1314 = vmul.f32 %v1231, %v1307
  %v1315 = vmul.f32 %v1234, %v1307
  %v1316 = vmul.f32 %v1237, %v1307
  %v1317 = vmul.f32 %v1240, %v1307
  %v1318 = vmul.f32 %v1243, %v1307
  %v1319 = vmul.f32 %v1246, %v1307
  %v1320 = vmul.f32 %v1249, %v1307
  %v1321 = vmul.f32 %v1252, %v1307
  %v1322 = vmul.f32 %v1255, %v1307
  %v1323 = vmul.f32 %v1258, %v1307
  %v1324 = vmul.f32 %v1261, %v1307
  %v1325 = vmul.f32 %v1264, %v1307
  %v1326 = vmul.f32 %v1267, %v1307
  %v1327 = vmul.f32 %v1270, %v1307
  %v1328 = vmul.f32 %v1273, %v1307
  %v1329 = vmul.f32 %v1276, %v1307
  %v1330 = vmul.f32 %v1279, %v1307
  %v1331 = vmul.f32 %v1282, %v1307
  %v1332 = vmul.f32 %v1285, %v1307
  %v1333 = vmul.f32 %v1288, %v1307
  %v1334 = vmul.f32 %v1291, %v1307
  %v1335 = vmul.f32 %v1294, %v1307
  %v1336 = vmul.f32 %v1297, %v1307
  %v1337 = vmul.f32 %v1300, %v1307
  %v1338 = vmul.f32 %v1303, %v1307
  %v1339 = vmul.f32 %v1306, %v1307
  %v1340 = vsub.f32 %v1179, %v1308
  %v1341 = vsub.f32 %v1180, %v1309
  %v1342 = vsub.f32 %v1181, %v1310
  %v1343 = vsub.f32 %v1182, %v1311
  %v1344 = vsub.f32 %v1183, %v1312
  %v1345 = vsub.f32 %v1184, %v1313
  %v1346 = vsub.f32 %v1185, %v1314
  %v1347 = vsub.f32 %v1186, %v1315
  %v1348 = vsub.f32 %v1187, %v1316
  %v1349 = vsub.f32 %v1188, %v1317
  %v1350 = vsub.f32 %v1189, %v1318
  %v1351 = vsub.f32 %v1190, %v1319
  %v1352 = vsub.f32 %v1191, %v1320
  %v1353 = vsub.f32 %v1192, %v1321
  %v1354 = vsub.f32 %v1193, %v1322
  %v1355 = vsub.f32 %v1194, %v1323
  %v1356 = vsub.f32 %v1195, %v1324
  %v1357 = vsub.f32 %v1196, %v1325
  %v1358 = vsub.f32 %v1197, %v1326
  %v1359 = vsub.f32 %v1198, %v1327
  %v1360 = vsub.f32 %v1199, %v1328
  %v1361 = vsub.f32 %v1200, %v1329
  %v1362 = vsub.f32 %v1201, %v1330
  %v1363 = vsub.f32 %v1202, %v1331
  %v1364 = vsub.f32 %v1203, %v1332
  %v1365 = vsub.f32 %v1204, %v1333
  %v1366 = vsub.f32 %v1205, %v1334
  %v1367 = vsub.f32 %v1206, %v1335
  %v1368 = vsub.f32 %v1207, %v1336
  %v1369 = vsub.f32 %v1208, %v1337
  %v1370 = vsub.f32 %v1209, %v1338
  %v1371 = vsub.f32 %v1210, %v1339
  %v1372 = vmul.f32 %v1340, %v1340
  %v1373 = vmul.f32 %v1341, %v1341
  %v1374 = vmul.f32 %v1342, %v1342
  %v1375 = vmul.f32 %v1343, %v1343
  %v1376 = vmul.f32 %v1344, %v1344
  %v1377 = vmul.f32 %v1345, %v1345
  %v1378 = vmul.f32 %v1346, %v1346
  %v1379 = vmul.f32 %v1347, %v1347
  %v1380 = vmul.f32 %v1348, %v1348
  %v1381 = vmul.f32 %v1349, %v1349
  %v1382 = vmul.f32 %v1350, %v1350
  %v1383 = vmul.f32 %v1351, %v1351
  %v1384 = vmul.f32 %v1352, %v1352
  %v1385 = vmul.f32 %v1353, %v1353
  %v1386 = vmul.f32 %v1354, %v1354
  %v1387 = vmul.f32 %v1355, %v1355
  %v1388 = vmul.f32 %v1356, %v1356
  %v1389 = vmul.f32 %v1357, %v1357
  %v1390 = vmul.f32 %v1358, %v1358
  %v1391 = vmul.f32 %v1359, %v1359
  %v1392 = vmul.f32 %v1360, %v1360
  %v1393 = vmul.f32 %v1361, %v1361
  %v1394 = vmul.f32 %v1362, %v1362
  %v1395 = vmul.f32 %v1363, %v1363
  %v1396 = vmul.f32 %v1364, %v1364
  %v1397 = vmul.f32 %v1365, %v1365
  %v1398 = vmul.f32 %v1366, %v1366
  %v1399 = vmul.f32 %v1367, %v1367
  %v1400 = vmul.f32 %v1368, %v1368
  %v1401 = vmul.f32 %v1369, %v1369
  %v1402 = vmul.f32 %v1370, %v1370
  %v1403 = vmul.f32 %v1371, %v1371
  %v1404 = vsel %vm71, %v1372, 0.0
  %1405 = vadd.xlane.f32.xlu0 %v1404
  %v1406 = vpop.xlane.xlu0 %1405
  %v1407 = vsel %vm71, %v1373, 0.0
  %1408 = vadd.xlane.f32.xlu0 %v1407
  %v1409 = vpop.xlane.xlu0 %1408
  %v1410 = vsel %vm71, %v1374, 0.0
  %1411 = vadd.xlane.f32.xlu0 %v1410
  %v1412 = vpop.xlane.xlu0 %1411
  %v1413 = vsel %vm71, %v1375, 0.0
  %1414 = vadd.xlane.f32.xlu0 %v1413
  %v1415 = vpop.xlane.xlu0 %1414
  %v1416 = vsel %vm71, %v1376, 0.0
  %1417 = vadd.xlane.f32.xlu0 %v1416
  %v1418 = vpop.xlane.xlu0 %1417
  %v1419 = vsel %vm71, %v1377, 0.0
  %1420 = vadd.xlane.f32.xlu0 %v1419
  %v1421 = vpop.xlane.xlu0 %1420
  %v1422 = vsel %vm71, %v1378, 0.0
  %1423 = vadd.xlane.f32.xlu0 %v1422
  %v1424 = vpop.xlane.xlu0 %1423
  %v1425 = vsel %vm71, %v1379, 0.0
  %1426 = vadd.xlane.f32.xlu0 %v1425
  %v1427 = vpop.xlane.xlu0 %1426
  %v1428 = vsel %vm71, %v1380, 0.0
  %1429 = vadd.xlane.f32.xlu0 %v1428
  %v1430 = vpop.xlane.xlu0 %1429
  %v1431 = vsel %vm71, %v1381, 0.0
  %1432 = vadd.xlane.f32.xlu0 %v1431
  %v1433 = vpop.xlane.xlu0 %1432
  %v1434 = vsel %vm71, %v1382, 0.0
  %1435 = vadd.xlane.f32.xlu0 %v1434
  %v1436 = vpop.xlane.xlu0 %1435
  %v1437 = vsel %vm71, %v1383, 0.0
  %1438 = vadd.xlane.f32.xlu0 %v1437
  %v1439 = vpop.xlane.xlu0 %1438
  %v1440 = vsel %vm71, %v1384, 0.0
  %1441 = vadd.xlane.f32.xlu0 %v1440
  %v1442 = vpop.xlane.xlu0 %1441
  %v1443 = vsel %vm71, %v1385, 0.0
  %1444 = vadd.xlane.f32.xlu0 %v1443
  %v1445 = vpop.xlane.xlu0 %1444
  %v1446 = vsel %vm71, %v1386, 0.0
  %1447 = vadd.xlane.f32.xlu0 %v1446
  %v1448 = vpop.xlane.xlu0 %1447
  %v1449 = vsel %vm71, %v1387, 0.0
  %1450 = vadd.xlane.f32.xlu0 %v1449
  %v1451 = vpop.xlane.xlu0 %1450
  %v1452 = vsel %vm71, %v1388, 0.0
  %1453 = vadd.xlane.f32.xlu0 %v1452
  %v1454 = vpop.xlane.xlu0 %1453
  %v1455 = vsel %vm71, %v1389, 0.0
  %1456 = vadd.xlane.f32.xlu0 %v1455
  %v1457 = vpop.xlane.xlu0 %1456
  %v1458 = vsel %vm71, %v1390, 0.0
  %1459 = vadd.xlane.f32.xlu0 %v1458
  %v1460 = vpop.xlane.xlu0 %1459
  %v1461 = vsel %vm71, %v1391, 0.0
  %1462 = vadd.xlane.f32.xlu0 %v1461
  %v1463 = vpop.xlane.xlu0 %1462
  %v1464 = vsel %vm71, %v1392, 0.0
  %1465 = vadd.xlane.f32.xlu0 %v1464
  %v1466 = vpop.xlane.xlu0 %1465
  %v1467 = vsel %vm71, %v1393, 0.0
  %1468 = vadd.xlane.f32.xlu0 %v1467
  %v1469 = vpop.xlane.xlu0 %1468
  %v1470 = vsel %vm71, %v1394, 0.0
  %1471 = vadd.xlane.f32.xlu0 %v1470
  %v1472 = vpop.xlane.xlu0 %1471
  %v1473 = vsel %vm71, %v1395, 0.0
  %1474 = vadd.xlane.f32.xlu0 %v1473
  %v1475 = vpop.xlane.xlu0 %1474
  %v1476 = vsel %vm71, %v1396, 0.0
  %1477 = vadd.xlane.f32.xlu0 %v1476
  %v1478 = vpop.xlane.xlu0 %1477
  %v1479 = vsel %vm71, %v1397, 0.0
  %1480 = vadd.xlane.f32.xlu0 %v1479
  %v1481 = vpop.xlane.xlu0 %1480
  %v1482 = vsel %vm71, %v1398, 0.0
  %1483 = vadd.xlane.f32.xlu0 %v1482
  %v1484 = vpop.xlane.xlu0 %1483
  %v1485 = vsel %vm71, %v1399, 0.0
  %1486 = vadd.xlane.f32.xlu0 %v1485
  %v1487 = vpop.xlane.xlu0 %1486
  %v1488 = vsel %vm71, %v1400, 0.0
  %1489 = vadd.xlane.f32.xlu0 %v1488
  %v1490 = vpop.xlane.xlu0 %1489
  %v1491 = vsel %vm71, %v1401, 0.0
  %1492 = vadd.xlane.f32.xlu0 %v1491
  %v1493 = vpop.xlane.xlu0 %1492
  %v1494 = vsel %vm71, %v1402, 0.0
  %1495 = vadd.xlane.f32.xlu0 %v1494
  %v1496 = vpop.xlane.xlu0 %1495
  %v1497 = vsel %vm71, %v1403, 0.0
  %1498 = vadd.xlane.f32.xlu0 %v1497
  %v1499 = vpop.xlane.xlu0 %1498
  %v1500 = vmul.f32 %v1406, %v1307
  %v1501 = vmul.f32 %v1409, %v1307
  %v1502 = vmul.f32 %v1412, %v1307
  %v1503 = vmul.f32 %v1415, %v1307
  %v1504 = vmul.f32 %v1418, %v1307
  %v1505 = vmul.f32 %v1421, %v1307
  %v1506 = vmul.f32 %v1424, %v1307
  %v1507 = vmul.f32 %v1427, %v1307
  %v1508 = vmul.f32 %v1430, %v1307
  %v1509 = vmul.f32 %v1433, %v1307
  %v1510 = vmul.f32 %v1436, %v1307
  %v1511 = vmul.f32 %v1439, %v1307
  %v1512 = vmul.f32 %v1442, %v1307
  %v1513 = vmul.f32 %v1445, %v1307
  %v1514 = vmul.f32 %v1448, %v1307
  %v1515 = vmul.f32 %v1451, %v1307
  %v1516 = vmul.f32 %v1454, %v1307
  %v1517 = vmul.f32 %v1457, %v1307
  %v1518 = vmul.f32 %v1460, %v1307
  %v1519 = vmul.f32 %v1463, %v1307
  %v1520 = vmul.f32 %v1466, %v1307
  %v1521 = vmul.f32 %v1469, %v1307
  %v1522 = vmul.f32 %v1472, %v1307
  %v1523 = vmul.f32 %v1475, %v1307
  %v1524 = vmul.f32 %v1478, %v1307
  %v1525 = vmul.f32 %v1481, %v1307
  %v1526 = vmul.f32 %v1484, %v1307
  %v1527 = vmul.f32 %v1487, %v1307
  %v1528 = vmul.f32 %v1490, %v1307
  %v1529 = vmul.f32 %v1493, %v1307
  %v1530 = vmul.f32 %v1496, %v1307
  %v1531 = vmul.f32 %v1499, %v1307
  %v1532 = vadd.f32 %v1500, 1e-05
  %v1533 = vadd.f32 %v1501, 1e-05
  %v1534 = vadd.f32 %v1502, 1e-05
  %v1535 = vadd.f32 %v1503, 1e-05
  %v1536 = vadd.f32 %v1504, 1e-05
  %v1537 = vadd.f32 %v1505, 1e-05
  %v1538 = vadd.f32 %v1506, 1e-05
  %v1539 = vadd.f32 %v1507, 1e-05
  %v1540 = vadd.f32 %v1508, 1e-05
  %v1541 = vadd.f32 %v1509, 1e-05
  %v1542 = vadd.f32 %v1510, 1e-05
  %v1543 = vadd.f32 %v1511, 1e-05
  %v1544 = vadd.f32 %v1512, 1e-05
  %v1545 = vadd.f32 %v1513, 1e-05
  %v1546 = vadd.f32 %v1514, 1e-05
  %v1547 = vadd.f32 %v1515, 1e-05
  %v1548 = vadd.f32 %v1516, 1e-05
  %v1549 = vadd.f32 %v1517, 1e-05
  %v1550 = vadd.f32 %v1518, 1e-05
  %v1551 = vadd.f32 %v1519, 1e-05
  %v1552 = vadd.f32 %v1520, 1e-05
  %v1553 = vadd.f32 %v1521, 1e-05
  %v1554 = vadd.f32 %v1522, 1e-05
  %v1555 = vadd.f32 %v1523, 1e-05
  %v1556 = vadd.f32 %v1524, 1e-05
  %v1557 = vadd.f32 %v1525, 1e-05
  %v1558 = vadd.f32 %v1526, 1e-05
  %v1559 = vadd.f32 %v1527, 1e-05
  %v1560 = vadd.f32 %v1528, 1e-05
  %v1561 = vadd.f32 %v1529, 1e-05
  %v1562 = vadd.f32 %v1530, 1e-05
  %v1563 = vadd.f32 %v1531, 1e-05
  %v1564 = vrsqrt.pop %v1532
  %v1565 = vrsqrt.pop %v1533
  %v1566 = vrsqrt.pop %v1534
  %v1567 = vrsqrt.pop %v1535
  %v1568 = vrsqrt.pop %v1536
  %v1569 = vrsqrt.pop %v1537
  %v1570 = vrsqrt.pop %v1538
  %v1571 = vrsqrt.pop %v1539
  %v1572 = vrsqrt.pop %v1540
  %v1573 = vrsqrt.pop %v1541
  %v1574 = vrsqrt.pop %v1542
  %v1575 = vrsqrt.pop %v1543
  %v1576 = vrsqrt.pop %v1544
  %v1577 = vrsqrt.pop %v1545
  %v1578 = vrsqrt.pop %v1546
  %v1579 = vrsqrt.pop %v1547
  %v1580 = vrsqrt.pop %v1548
  %v1581 = vrsqrt.pop %v1549
  %v1582 = vrsqrt.pop %v1550
  %v1583 = vrsqrt.pop %v1551
  %v1584 = vrsqrt.pop %v1552
  %v1585 = vrsqrt.pop %v1553
  %v1586 = vrsqrt.pop %v1554
  %v1587 = vrsqrt.pop %v1555
  %v1588 = vrsqrt.pop %v1556
  %v1589 = vrsqrt.pop %v1557
  %v1590 = vrsqrt.pop %v1558
  %v1591 = vrsqrt.pop %v1559
  %v1592 = vrsqrt.pop %v1560
  %v1593 = vrsqrt.pop %v1561
  %v1594 = vrsqrt.pop %v1562
  %v1595 = vrsqrt.pop %v1563
  %v1596 = vmul.f32 %v1340, %v1564
  %v1597 = vmul.f32 %v1341, %v1565
  %v1598 = vmul.f32 %v1342, %v1566
  %v1599 = vmul.f32 %v1343, %v1567
  %v1600 = vmul.f32 %v1344, %v1568
  %v1601 = vmul.f32 %v1345, %v1569
  %v1602 = vmul.f32 %v1346, %v1570
  %v1603 = vmul.f32 %v1347, %v1571
  %v1604 = vmul.f32 %v1348, %v1572
  %v1605 = vmul.f32 %v1349, %v1573
  %v1606 = vmul.f32 %v1350, %v1574
  %v1607 = vmul.f32 %v1351, %v1575
  %v1608 = vmul.f32 %v1352, %v1576
  %v1609 = vmul.f32 %v1353, %v1577
  %v1610 = vmul.f32 %v1354, %v1578
  %v1611 = vmul.f32 %v1355, %v1579
  %v1612 = vmul.f32 %v1356, %v1580
  %v1613 = vmul.f32 %v1357, %v1581
  %v1614 = vmul.f32 %v1358, %v1582
  %v1615 = vmul.f32 %v1359, %v1583
  %v1616 = vmul.f32 %v1360, %v1584
  %v1617 = vmul.f32 %v1361, %v1585
  %v1618 = vmul.f32 %v1362, %v1586
  %v1619 = vmul.f32 %v1363, %v1587
  %v1620 = vmul.f32 %v1364, %v1588
  %v1621 = vmul.f32 %v1365, %v1589
  %v1622 = vmul.f32 %v1366, %v1590
  %v1623 = vmul.f32 %v1367, %v1591
  %v1624 = vmul.f32 %v1368, %v1592
  %v1625 = vmul.f32 %v1369, %v1593
  %v1626 = vmul.f32 %v1370, %v1594
  %v1627 = vmul.f32 %v1371, %v1595
  %v1628 = vld [vmem:[%s5] sm:$0x1]
  %v1630 = vlaneseq
  %v1631 = vshrl.u32 %v1630, 7
  %v1632 = vsub.s32 0, %v1631
  %v1633 = vrot.slane %v1628, %v1632
  %v1635 = vmul.f32 %v1596, %v1633
  %v1636 = vmul.f32 %v1597, %v1633
  %v1637 = vmul.f32 %v1598, %v1633
  %v1638 = vmul.f32 %v1599, %v1633
  %v1639 = vmul.f32 %v1600, %v1633
  %v1640 = vmul.f32 %v1601, %v1633
  %v1641 = vmul.f32 %v1602, %v1633
  %v1642 = vmul.f32 %v1603, %v1633
  %v1643 = vmul.f32 %v1604, %v1633
  %v1644 = vmul.f32 %v1605, %v1633
  %v1645 = vmul.f32 %v1606, %v1633
  %v1646 = vmul.f32 %v1607, %v1633
  %v1647 = vmul.f32 %v1608, %v1633
  %v1648 = vmul.f32 %v1609, %v1633
  %v1649 = vmul.f32 %v1610, %v1633
  %v1650 = vmul.f32 %v1611, %v1633
  %v1651 = vmul.f32 %v1612, %v1633
  %v1652 = vmul.f32 %v1613, %v1633
  %v1653 = vmul.f32 %v1614, %v1633
  %v1654 = vmul.f32 %v1615, %v1633
  %v1655 = vmul.f32 %v1616, %v1633
  %v1656 = vmul.f32 %v1617, %v1633
  %v1657 = vmul.f32 %v1618, %v1633
  %v1658 = vmul.f32 %v1619, %v1633
  %v1659 = vmul.f32 %v1620, %v1633
  %v1660 = vmul.f32 %v1621, %v1633
  %v1661 = vmul.f32 %v1622, %v1633
  %v1662 = vmul.f32 %v1623, %v1633
  %v1663 = vmul.f32 %v1624, %v1633
  %v1664 = vmul.f32 %v1625, %v1633
  %v1665 = vmul.f32 %v1626, %v1633
  %v1666 = vmul.f32 %v1627, %v1633
  %v1667 = vsel %vm71, %v1635, 0.0
  %1668 = vadd.xlane.f32.xlu0 %v1667
  %v1669 = vpop.xlane.xlu0 %1668
  %v1670 = vsel %vm71, %v1636, 0.0
  %1671 = vadd.xlane.f32.xlu0 %v1670
  %v1672 = vpop.xlane.xlu0 %1671
  %v1673 = vsel %vm71, %v1637, 0.0
  %1674 = vadd.xlane.f32.xlu0 %v1673
  %v1675 = vpop.xlane.xlu0 %1674
  %v1676 = vsel %vm71, %v1638, 0.0
  %1677 = vadd.xlane.f32.xlu0 %v1676
  %v1678 = vpop.xlane.xlu0 %1677
  %v1679 = vsel %vm71, %v1639, 0.0
  %1680 = vadd.xlane.f32.xlu0 %v1679
  %v1681 = vpop.xlane.xlu0 %1680
  %v1682 = vsel %vm71, %v1640, 0.0
  %1683 = vadd.xlane.f32.xlu0 %v1682
  %v1684 = vpop.xlane.xlu0 %1683
  %v1685 = vsel %vm71, %v1641, 0.0
  %1686 = vadd.xlane.f32.xlu0 %v1685
  %v1687 = vpop.xlane.xlu0 %1686
  %v1688 = vsel %vm71, %v1642, 0.0
  %1689 = vadd.xlane.f32.xlu0 %v1688
  %v1690 = vpop.xlane.xlu0 %1689
  %v1691 = vsel %vm71, %v1643, 0.0
  %1692 = vadd.xlane.f32.xlu0 %v1691
  %v1693 = vpop.xlane.xlu0 %1692
  %v1694 = vsel %vm71, %v1644, 0.0
  %1695 = vadd.xlane.f32.xlu0 %v1694
  %v1696 = vpop.xlane.xlu0 %1695
  %v1697 = vsel %vm71, %v1645, 0.0
  %1698 = vadd.xlane.f32.xlu0 %v1697
  %v1699 = vpop.xlane.xlu0 %1698
  %v1700 = vsel %vm71, %v1646, 0.0
  %1701 = vadd.xlane.f32.xlu0 %v1700
  %v1702 = vpop.xlane.xlu0 %1701
  %v1703 = vsel %vm71, %v1647, 0.0
  %1704 = vadd.xlane.f32.xlu0 %v1703
  %v1705 = vpop.xlane.xlu0 %1704
  %v1706 = vsel %vm71, %v1648, 0.0
  %1707 = vadd.xlane.f32.xlu0 %v1706
  %v1708 = vpop.xlane.xlu0 %1707
  %v1709 = vsel %vm71, %v1649, 0.0
  %1710 = vadd.xlane.f32.xlu0 %v1709
  %v1711 = vpop.xlane.xlu0 %1710
  %v1712 = vsel %vm71, %v1650, 0.0
  %1713 = vadd.xlane.f32.xlu0 %v1712
  %v1714 = vpop.xlane.xlu0 %1713
  %v1715 = vsel %vm71, %v1651, 0.0
  %1716 = vadd.xlane.f32.xlu0 %v1715
  %v1717 = vpop.xlane.xlu0 %1716
  %v1718 = vsel %vm71, %v1652, 0.0
  %1719 = vadd.xlane.f32.xlu0 %v1718
  %v1720 = vpop.xlane.xlu0 %1719
  %v1721 = vsel %vm71, %v1653, 0.0
  %1722 = vadd.xlane.f32.xlu0 %v1721
  %v1723 = vpop.xlane.xlu0 %1722
  %v1724 = vsel %vm71, %v1654, 0.0
  %1725 = vadd.xlane.f32.xlu0 %v1724
  %v1726 = vpop.xlane.xlu0 %1725
  %v1727 = vsel %vm71, %v1655, 0.0
  %1728 = vadd.xlane.f32.xlu0 %v1727
  %v1729 = vpop.xlane.xlu0 %1728
  %v1730 = vsel %vm71, %v1656, 0.0
  %1731 = vadd.xlane.f32.xlu0 %v1730
  %v1732 = vpop.xlane.xlu0 %1731
  %v1733 = vsel %vm71, %v1657, 0.0
  %1734 = vadd.xlane.f32.xlu0 %v1733
  %v1735 = vpop.xlane.xlu0 %1734
  %v1736 = vsel %vm71, %v1658, 0.0
  %1737 = vadd.xlane.f32.xlu0 %v1736
  %v1738 = vpop.xlane.xlu0 %1737
  %v1739 = vsel %vm71, %v1659, 0.0
  %1740 = vadd.xlane.f32.xlu0 %v1739
  %v1741 = vpop.xlane.xlu0 %1740
  %v1742 = vsel %vm71, %v1660, 0.0
  %1743 = vadd.xlane.f32.xlu0 %v1742
  %v1744 = vpop.xlane.xlu0 %1743
  %v1745 = vsel %vm71, %v1661, 0.0
  %1746 = vadd.xlane.f32.xlu0 %v1745
  %v1747 = vpop.xlane.xlu0 %1746
  %v1748 = vsel %vm71, %v1662, 0.0
  %1749 = vadd.xlane.f32.xlu0 %v1748
  %v1750 = vpop.xlane.xlu0 %1749
  %v1751 = vsel %vm71, %v1663, 0.0
  %1752 = vadd.xlane.f32.xlu0 %v1751
  %v1753 = vpop.xlane.xlu0 %1752
  %v1754 = vsel %vm71, %v1664, 0.0
  %1755 = vadd.xlane.f32.xlu0 %v1754
  %v1756 = vpop.xlane.xlu0 %1755
  %v1757 = vsel %vm71, %v1665, 0.0
  %1758 = vadd.xlane.f32.xlu0 %v1757
  %v1759 = vpop.xlane.xlu0 %1758
  %v1760 = vsel %vm71, %v1666, 0.0
  %1761 = vadd.xlane.f32.xlu0 %v1760
  %v1762 = vpop.xlane.xlu0 %1761
  %v1763 = vld [vmem:[#allocation2] sm:$0x1]
  %v1765 = vlaneseq
  %v1766 = vshrl.u32 %v1765, 7
  %v1767 = vsub.s32 0, %v1766
  %v1768 = vrot.slane %v1763, %v1767
  %v1770 = vadd.f32 %v1669, %v1768
  %v1771 = vadd.f32 %v1672, %v1768
  %v1772 = vadd.f32 %v1675, %v1768
  %v1773 = vadd.f32 %v1678, %v1768
  %v1774 = vadd.f32 %v1681, %v1768
  %v1775 = vadd.f32 %v1684, %v1768
  %v1776 = vadd.f32 %v1687, %v1768
  %v1777 = vadd.f32 %v1690, %v1768
  %v1778 = vadd.f32 %v1693, %v1768
  %v1779 = vadd.f32 %v1696, %v1768
  %v1780 = vadd.f32 %v1699, %v1768
  %v1781 = vadd.f32 %v1702, %v1768
  %v1782 = vadd.f32 %v1705, %v1768
  %v1783 = vadd.f32 %v1708, %v1768
  %v1784 = vadd.f32 %v1711, %v1768
  %v1785 = vadd.f32 %v1714, %v1768
  %v1786 = vadd.f32 %v1717, %v1768
  %v1787 = vadd.f32 %v1720, %v1768
  %v1788 = vadd.f32 %v1723, %v1768
  %v1789 = vadd.f32 %v1726, %v1768
  %v1790 = vadd.f32 %v1729, %v1768
  %v1791 = vadd.f32 %v1732, %v1768
  %v1792 = vadd.f32 %v1735, %v1768
  %v1793 = vadd.f32 %v1738, %v1768
  %v1794 = vadd.f32 %v1741, %v1768
  %v1795 = vadd.f32 %v1744, %v1768
  %v1796 = vadd.f32 %v1747, %v1768
  %v1797 = vadd.f32 %v1750, %v1768
  %v1798 = vadd.f32 %v1753, %v1768
  %v1799 = vadd.f32 %v1756, %v1768
  %v1800 = vadd.f32 %v1759, %v1768
  %v1801 = vadd.f32 %v1762, %v1768
  %vm1802 = vcmask 7168
  %1803 = vst.msk [vmem:[%s7] sm:$0xff] %vm1802, %v1770
  %1804 = vst.msk [vmem:[%s7 + $0x8] sm:$0xff] %vm1802, %v1771
  %1805 = vst.msk [vmem:[%s7 + $0x10] sm:$0xff] %vm1802, %v1772
  %1806 = vst.msk [vmem:[%s7 + $0x18] sm:$0xff] %vm1802, %v1773
  %1807 = vst.msk [vmem:[%s7 + $0x20] sm:$0xff] %vm1802, %v1774
  %1808 = vst.msk [vmem:[%s7 + $0x28] sm:$0xff] %vm1802, %v1775
  %1809 = vst.msk [vmem:[%s7 + $0x30] sm:$0xff] %vm1802, %v1776
  %1810 = vst.msk [vmem:[%s7 + $0x38] sm:$0xff] %vm1802, %v1777
  %1811 = vst.msk [vmem:[%s7 + $0x40] sm:$0xff] %vm1802, %v1778
  %1812 = vst.msk [vmem:[%s7 + $0x48] sm:$0xff] %vm1802, %v1779
  %1813 = vst.msk [vmem:[%s7 + $0x50] sm:$0xff] %vm1802, %v1780
  %1814 = vst.msk [vmem:[%s7 + $0x58] sm:$0xff] %vm1802, %v1781
  %1815 = vst.msk [vmem:[%s7 + $0x60] sm:$0xff] %vm1802, %v1782
  %1816 = vst.msk [vmem:[%s7 + $0x68] sm:$0xff] %vm1802, %v1783
  %1817 = vst.msk [vmem:[%s7 + $0x70] sm:$0xff] %vm1802, %v1784
  %1818 = vst.msk [vmem:[%s7 + $0x78] sm:$0xff] %vm1802, %v1785
  %1819 = vst.msk [vmem:[%s7 + $0x80] sm:$0xff] %vm1802, %v1786
  %1820 = vst.msk [vmem:[%s7 + $0x88] sm:$0xff] %vm1802, %v1787
  %1821 = vst.msk [vmem:[%s7 + $0x90] sm:$0xff] %vm1802, %v1788
  %1822 = vst.msk [vmem:[%s7 + $0x98] sm:$0xff] %vm1802, %v1789
  %1823 = vst.msk [vmem:[%s7 + $0xa0] sm:$0xff] %vm1802, %v1790
  %1824 = vst.msk [vmem:[%s7 + $0xa8] sm:$0xff] %vm1802, %v1791
  %1825 = vst.msk [vmem:[%s7 + $0xb0] sm:$0xff] %vm1802, %v1792
  %1826 = vst.msk [vmem:[%s7 + $0xb8] sm:$0xff] %vm1802, %v1793
  %1827 = vst.msk [vmem:[%s7 + $0xc0] sm:$0xff] %vm1802, %v1794
  %1828 = vst.msk [vmem:[%s7 + $0xc8] sm:$0xff] %vm1802, %v1795
  %1829 = vst.msk [vmem:[%s7 + $0xd0] sm:$0xff] %vm1802, %v1796
  %1830 = vst.msk [vmem:[%s7 + $0xd8] sm:$0xff] %vm1802, %v1797
  %1831 = vst.msk [vmem:[%s7 + $0xe0] sm:$0xff] %vm1802, %v1798
  %1832 = vst.msk [vmem:[%s7 + $0xe8] sm:$0xff] %vm1802, %v1799
  %1833 = vst.msk [vmem:[%s7 + $0xf0] sm:$0xff] %vm1802, %v1800
  %1834 = vst.msk [vmem:[%s7 + $0xf8] sm:$0xff] %vm1802, %v1801
  // Predicated region
  $region30: #{tpu_custom_call.1} parent=0 // pred_check
    _
  $region31: #{tpu_custom_call.1} parent=0 // pred_check_branch
    %1836 = sbr.rel (0) target = $region33
  $region32: #{tpu_custom_call.1} parent=0 // pred_region
    _
  $region33: #{tpu_custom_call.1} parent=0 // pred_fallthru
    _
  // Predicated region
  $region34: #{tpu_custom_call.1} parent=0 // pred_check
    _
  $region35: #{tpu_custom_call.1} parent=0 // pred_check_branch
    %1838 = sbr.rel (0) target = $region37
  $region36: #{tpu_custom_call.1} parent=0 // pred_region
    _
  $region37: #{tpu_custom_call.1} parent=0 // pred_fallthru
    _

</llo_original>
